<compile_context>
chip_gen: v5e
topology: v5e:2x2
jax: 0.10.0
libtpu: 0.0.40
codegen_flags: <defaults>
</compile_context>

<pallas_src>
import functools

import jax
import jax.numpy as jnp
import numpy as np
from jax.experimental import pallas as pl
from jax.experimental.pallas import tpu as pltpu


def _anchor_free_kernel(x_ref, w1_ref, b1_ref, w2_ref, b2_ref, o_ref, xpad_ref,
                        *, hgt, wdt, wp):
    """One image per grid step.

    x_ref   : (1, Cin, H*W)   raw input image (native dtype), spatial flattened
    w1_ref  : (9, Cin, Cin)   f32, 3x3 taps (BN scale folded), layout [tap, out, in]
    b1_ref  : (Cin, 1)        f32, folded conv1 bias + BN shift
    w2_ref  : (Cout, Cin)     f32, 1x1 conv weight
    b2_ref  : (Cout, 1)       f32
    o_ref   : (1, Cout, Mext) bf16, Mext = H*(W+2); wrap columns sliced off outside
    xpad_ref: (Cin, Lpad)     f32 scratch holding the zero-padded flattened image
    """
    cout, mext = o_ref.shape[1], o_ref.shape[2]

    # ---- assemble zero-padded (H+2, W+2) image in VMEM (no padded HBM copy) ----
    xpad_ref[...] = jnp.zeros_like(xpad_ref)
    x = x_ref[0].astype(xpad_ref.dtype)                        # (Cin, H*W)
    for r in range(hgt):                                       # statically unrolled
        dst = (r + 1) * wp + 1
        xpad_ref[:, dst:dst + wdt] = x[:, r * wdt:(r + 1) * wdt]

    # ---- 3x3 conv as 9 shifted lane-slices, f32 accumulation on the MXU ----
    acc = None
    for kh in range(3):
        seg = xpad_ref[:, kh * wp:kh * wp + mext + 2]          # hoisted per-kh load
        for kw in range(3):
            tap = seg[:, kw:kw + mext]                         # (Cin, Mext)
            d = jnp.dot(w1_ref[kh * 3 + kw], tap,
                        preferred_element_type=jnp.float32)
            acc = d if acc is None else acc + d

    h = jnp.maximum(acc + b1_ref[...], 0.0)                    # folded BN + bias, ReLU
    o = jnp.dot(w2_ref[...], h, preferred_element_type=jnp.float32)
    o_ref[0] = (o + b2_ref[...]).astype(o_ref.dtype)           # bf16 store


def _vmem_limit_bytes(per_step_bytes):
    """Generation-aware VMEM request: never the whole physical VMEM."""
    try:
        cap = int(pltpu.get_tpu_info().vmem_capacity_bytes)
    except Exception:  # pragma: no cover - conservative fallback
        cap = 64 * 2**20
    cap = (cap * 3) // 4          # ~48 MiB on v7x, ~96 MiB on v5e/v6e
    return int(min(cap, max(32 * 2**20, 2 * per_step_bytes)))


def anchor_free_forward(x_nchw, params):
    """Forward pass of AnchorFreeModule. x_nchw: (N, Cin, H, W) -> (N, Cout, H, W)."""
    eps = 1e-5
    w1, b1 = params["w1"], params["b1"]
    gamma, beta = params["gamma"], params["beta"]
    run_mean, run_var = params["run_mean"], params["run_var"]
    w2, b2 = params["w2"], params["b2"]

    N, Cin, H, W = x_nchw.shape
    Cout = w2.shape[0]
    Hp, Wp = H + 2, W + 2
    Mext = H * Wp                                  # extended width: 2 garbage cols/row
    Lpad = ((Hp * Wp + 2 + 127) // 128) * 128      # padded flat spatial (+2 for last tap)

    # ---- fold BatchNorm (eval running stats) + conv1 bias into conv1 (f32) ----
    scale = gamma / jnp.sqrt(run_var + eps)                               # (Cin,)
    shift = beta - run_mean * scale
    w1f = (w1 * scale[:, None, None, None]).astype(jnp.float32)          # (Cin,Cin,3,3)
    b1f = (scale * b1 + shift).reshape(Cin, 1).astype(jnp.float32)
    w1_taps = jnp.transpose(w1f, (2, 3, 0, 1)).reshape(9, Cin, Cin)      # [tap,out,in]
    w2_mat = w2[:, :, 0, 0].astype(jnp.float32)                          # (Cout, Cin)
    b2_col = b2.reshape(Cout, 1).astype(jnp.float32)

    # ---- input stays raw; flatten spatial into the lane axis (free reshape) ----
    xf = x_nchw.reshape(N, Cin, H * W)
    x_item = np.dtype(xf.dtype).itemsize

    # ---- VMEM budget: double-buffered blocks + scratch + live intermediates ----
    per_step = (2 * Cin * H * W * x_item            # input block (double-buffered)
                + 2 * Cout * Mext * 2               # bf16 output block (double-buffered)
                + Cin * Lpad * 4                    # padded scratch
                + (3 * Cin + Cout) * Mext * 4       # acc / hoisted seg / o (f32)
                + (9 * Cin * Cin + Cout * Cin + Cin + Cout) * 4)
    vmem_limit = _vmem_limit_bytes(per_step)

    kernel = functools.partial(_anchor_free_kernel, hgt=H, wdt=W, wp=Wp)
    full2 = lambda n: (0, 0)

    out_ext = pl.pallas_call(
        kernel,
        out_shape=jax.ShapeDtypeStruct((N, Cout, Mext), jnp.bfloat16),
        grid_spec=pltpu.PrefetchScalarGridSpec(
            num_scalar_prefetch=0,
            grid=(N,),
            in_specs=[
                pl.BlockSpec((1, Cin, H * W), lambda n: (n, 0, 0)),   # raw image
                pl.BlockSpec((9, Cin, Cin), lambda n: (0, 0, 0)),     # conv1 taps (BN folded)
                pl.BlockSpec((Cin, 1), full2),                        # folded bias
                pl.BlockSpec((Cout, Cin), full2),                     # conv2 weight
                pl.BlockSpec((Cout, 1), full2),                       # conv2 bias
            ],
            out_specs=pl.BlockSpec((1, Cout, Mext), lambda n: (n, 0, 0)),
            scratch_shapes=[pltpu.VMEM((Cin, Lpad), jnp.float32)],
        ),
        compiler_params=pltpu.CompilerParams(
            dimension_semantics=("parallel",),
            vmem_limit_bytes=vmem_limit),
    )(xf, w1_taps, b1f, w2_mat, b2_col)

    # drop the 2 wrap-around columns per row (already NCHW); cast back in the same pass
    out = out_ext.reshape(N, Cout, H, Wp)[:, :, :, :W].astype(x_nchw.dtype)
    return out


def init_params(key, in_channels, out_channels):
    ks = jax.random.split(key, 6)
    return {
        "w1": 0.1 * jax.random.normal(ks[0], (in_channels, in_channels, 3, 3),
                                      jnp.float32),
        "b1": 0.1 * jax.random.normal(ks[1], (in_channels,), jnp.float32),
        "gamma": 1.0 + 0.1 * jax.random.normal(ks[2], (in_channels,), jnp.float32),
        "beta": 0.1 * jax.random.normal(ks[3], (in_channels,), jnp.float32),
        "run_mean": jnp.zeros((in_channels,), jnp.float32),   # PyTorch init
        "run_var": jnp.ones((in_channels,), jnp.float32),     # PyTorch init
        "w2": 0.1 * jax.random.normal(ks[4], (out_channels, in_channels, 1, 1),
                                      jnp.float32),
        "b2": 0.1 * jax.random.normal(ks[5], (out_channels,), jnp.float32),
    }


def _reference(x_nchw, params):
    """Pure-JAX f32 reference (lax conv) for correctness checking."""
    eps = 1e-5
    h = jax.lax.conv_general_dilated(
        x_nchw, params["w1"], window_strides=(1, 1), padding=((1, 1), (1, 1)),
        dimension_numbers=("NCHW", "OIHW", "NCHW"))
    h = h + params["b1"][None, :, None, None]
    scale = params["gamma"] / jnp.sqrt(params["run_var"] + eps)
    shift = params["beta"] - params["run_mean"] * scale
    h = h * scale[None, :, None, None] + shift[None, :, None, None]
    h = jnp.maximum(h, 0.0)
    o = jax.lax.conv_general_dilated(
        h, params["w2"], window_strides=(1, 1), padding=((0, 0), (0, 0)),
        dimension_numbers=("NCHW", "OIHW", "NCHW"))
    return o + params["b2"][None, :, None, None]


if __name__ == "__main__":
    key = jax.random.PRNGKey(0)
    k_x, k_p = jax.random.split(key)

    N, Cin, H, W = 2, 4, 16, 16
    Cout = 8
    x = jax.random.normal(k_x, (N, Cin, H, W), jnp.float32)
    params = init_params(k_p, Cin, Cout)

    out = jax.block_until_ready(jax.jit(anchor_free_forward)(x, params))
    ref = jax.block_until_ready(_reference(x, params))

    # All math is f32; only the final store is bf16 -> comfortable tolerance.
    np.testing.assert_allclose(np.asarray(out), np.asarray(ref), rtol=2e-2, atol=2e-2)
    print("KERNEL_OK")
</pallas_src>

<mosaic_0001>
module attributes {stable_mosaic.version = 11 : i64} {
  func.func @_anchor_free_kernel(%arg0: i32, %arg1: memref<1x4x256xf32, #tpu.memory_space<vmem>>, %arg2: memref<9x4x4xf32, #tpu.memory_space<vmem>>, %arg3: memref<4x1xf32, #tpu.memory_space<vmem>>, %arg4: memref<8x4xf32, #tpu.memory_space<vmem>>, %arg5: memref<8x1xf32, #tpu.memory_space<vmem>>, %arg6: memref<1x8x288xbf16, #tpu.memory_space<vmem>>, %arg7: memref<4x384xf32, #tpu.memory_space<vmem>>) attributes {dimension_semantics = [#tpu.dimension_semantics<parallel>], iteration_bounds = array<i64: 2>, scalar_prefetch = 0 : i64, scratch_operands = 1 : i64, tpu.core_type = #tpu.core_type<tc>, window_params = [{transform_indices = @transform_0, window_bounds = array<i64: 1, 4, 256>}, {pipeline_mode = #tpu.pipeline_mode<synchronous>, transform_indices = @transform_1, window_bounds = array<i64: 9, 4, 4>}, {pipeline_mode = #tpu.pipeline_mode<synchronous>, transform_indices = @transform_2, window_bounds = array<i64: 4, 1>}, {pipeline_mode = #tpu.pipeline_mode<synchronous>, transform_indices = @transform_3, window_bounds = array<i64: 8, 4>}, {pipeline_mode = #tpu.pipeline_mode<synchronous>, transform_indices = @transform_4, window_bounds = array<i64: 8, 1>}, {transform_indices = @transform_5, window_bounds = array<i64: 1, 8, 288>}]} {
    %cst = arith.constant 0.000000e+00 : f32
    %0 = vector.broadcast %cst : f32 to vector<4x384xf32>
    %c0 = arith.constant 0 : index
    %c0_0 = arith.constant 0 : index
    %1 = vector.load %arg7[%c0, %c0_0] : memref<4x384xf32, #tpu.memory_space<vmem>>, vector<4x384xf32>
    tpu.vector_store %arg7[%c0, %c0_0], %0 {strides = array<i32>} : memref<4x384xf32, #tpu.memory_space<vmem>>, vector<4x384xf32>,
    %c0_1 = arith.constant 0 : index
    %c0_2 = arith.constant 0 : index
    %c0_3 = arith.constant 0 : index
    %2 = vector.load %arg1[%c0_1, %c0_2, %c0_3] : memref<1x4x256xf32, #tpu.memory_space<vmem>>, vector<1x4x256xf32>
    %3 = vector.shape_cast %2 : vector<1x4x256xf32> to vector<4x256xf32>
    %4 = vector.extract_strided_slice %3 {offsets = [0, 0], sizes = [4, 16], strides = [1, 1]} : vector<4x256xf32> to vector<4x16xf32>
    %c0_4 = arith.constant 0 : index
    %c19 = arith.constant 19 : index
    %5 = vector.load %arg7[%c0_4, %c19] : memref<4x384xf32, #tpu.memory_space<vmem>>, vector<4x16xf32>
    tpu.vector_store %arg7[%c0_4, %c19], %4 {strides = array<i32>} : memref<4x384xf32, #tpu.memory_space<vmem>>, vector<4x16xf32>,
    %6 = vector.extract_strided_slice %3 {offsets = [0, 16], sizes = [4, 16], strides = [1, 1]} : vector<4x256xf32> to vector<4x16xf32>
    %c0_5 = arith.constant 0 : index
    %c37 = arith.constant 37 : index
    %7 = vector.load %arg7[%c0_5, %c37] : memref<4x384xf32, #tpu.memory_space<vmem>>, vector<4x16xf32>
    tpu.vector_store %arg7[%c0_5, %c37], %6 {strides = array<i32>} : memref<4x384xf32, #tpu.memory_space<vmem>>, vector<4x16xf32>,
    %8 = vector.extract_strided_slice %3 {offsets = [0, 32], sizes = [4, 16], strides = [1, 1]} : vector<4x256xf32> to vector<4x16xf32>
    %c0_6 = arith.constant 0 : index
    %c55 = arith.constant 55 : index
    %9 = vector.load %arg7[%c0_6, %c55] : memref<4x384xf32, #tpu.memory_space<vmem>>, vector<4x16xf32>
    tpu.vector_store %arg7[%c0_6, %c55], %8 {strides = array<i32>} : memref<4x384xf32, #tpu.memory_space<vmem>>, vector<4x16xf32>,
    %10 = vector.extract_strided_slice %3 {offsets = [0, 48], sizes = [4, 16], strides = [1, 1]} : vector<4x256xf32> to vector<4x16xf32>
    %c0_7 = arith.constant 0 : index
    %c73 = arith.constant 73 : index
    %11 = vector.load %arg7[%c0_7, %c73] : memref<4x384xf32, #tpu.memory_space<vmem>>, vector<4x16xf32>
    tpu.vector_store %arg7[%c0_7, %c73], %10 {strides = array<i32>} : memref<4x384xf32, #tpu.memory_space<vmem>>, vector<4x16xf32>,
    %12 = vector.extract_strided_slice %3 {offsets = [0, 64], sizes = [4, 16], strides = [1, 1]} : vector<4x256xf32> to vector<4x16xf32>
    %c0_8 = arith.constant 0 : index
    %c91 = arith.constant 91 : index
    %13 = vector.load %arg7[%c0_8, %c91] : memref<4x384xf32, #tpu.memory_space<vmem>>, vector<4x16xf32>
    tpu.vector_store %arg7[%c0_8, %c91], %12 {strides = array<i32>} : memref<4x384xf32, #tpu.memory_space<vmem>>, vector<4x16xf32>,
    %14 = vector.extract_strided_slice %3 {offsets = [0, 80], sizes = [4, 16], strides = [1, 1]} : vector<4x256xf32> to vector<4x16xf32>
    %c0_9 = arith.constant 0 : index
    %c109 = arith.constant 109 : index
    %15 = vector.load %arg7[%c0_9, %c109] : memref<4x384xf32, #tpu.memory_space<vmem>>, vector<4x16xf32>
    tpu.vector_store %arg7[%c0_9, %c109], %14 {strides = array<i32>} : memref<4x384xf32, #tpu.memory_space<vmem>>, vector<4x16xf32>,
    %16 = vector.extract_strided_slice %3 {offsets = [0, 96], sizes = [4, 16], strides = [1, 1]} : vector<4x256xf32> to vector<4x16xf32>
    %c0_10 = arith.constant 0 : index
    %c127 = arith.constant 127 : index
    %17 = vector.load %arg7[%c0_10, %c127] : memref<4x384xf32, #tpu.memory_space<vmem>>, vector<4x16xf32>
    tpu.vector_store %arg7[%c0_10, %c127], %16 {strides = array<i32>} : memref<4x384xf32, #tpu.memory_space<vmem>>, vector<4x16xf32>,
    %18 = vector.extract_strided_slice %3 {offsets = [0, 112], sizes = [4, 16], strides = [1, 1]} : vector<4x256xf32> to vector<4x16xf32>
    %c0_11 = arith.constant 0 : index
    %c145 = arith.constant 145 : index
    %19 = vector.load %arg7[%c0_11, %c145] : memref<4x384xf32, #tpu.memory_space<vmem>>, vector<4x16xf32>
    tpu.vector_store %arg7[%c0_11, %c145], %18 {strides = array<i32>} : memref<4x384xf32, #tpu.memory_space<vmem>>, vector<4x16xf32>,
    %20 = vector.extract_strided_slice %3 {offsets = [0, 128], sizes = [4, 16], strides = [1, 1]} : vector<4x256xf32> to vector<4x16xf32>
    %c0_12 = arith.constant 0 : index
    %c163 = arith.constant 163 : index
    %21 = vector.load %arg7[%c0_12, %c163] : memref<4x384xf32, #tpu.memory_space<vmem>>, vector<4x16xf32>
    tpu.vector_store %arg7[%c0_12, %c163], %20 {strides = array<i32>} : memref<4x384xf32, #tpu.memory_space<vmem>>, vector<4x16xf32>,
    %22 = vector.extract_strided_slice %3 {offsets = [0, 144], sizes = [4, 16], strides = [1, 1]} : vector<4x256xf32> to vector<4x16xf32>
    %c0_13 = arith.constant 0 : index
    %c181 = arith.constant 181 : index
    %23 = vector.load %arg7[%c0_13, %c181] : memref<4x384xf32, #tpu.memory_space<vmem>>, vector<4x16xf32>
    tpu.vector_store %arg7[%c0_13, %c181], %22 {strides = array<i32>} : memref<4x384xf32, #tpu.memory_space<vmem>>, vector<4x16xf32>,
    %24 = vector.extract_strided_slice %3 {offsets = [0, 160], sizes = [4, 16], strides = [1, 1]} : vector<4x256xf32> to vector<4x16xf32>
    %c0_14 = arith.constant 0 : index
    %c199 = arith.constant 199 : index
    %25 = vector.load %arg7[%c0_14, %c199] : memref<4x384xf32, #tpu.memory_space<vmem>>, vector<4x16xf32>
    tpu.vector_store %arg7[%c0_14, %c199], %24 {strides = array<i32>} : memref<4x384xf32, #tpu.memory_space<vmem>>, vector<4x16xf32>,
    %26 = vector.extract_strided_slice %3 {offsets = [0, 176], sizes = [4, 16], strides = [1, 1]} : vector<4x256xf32> to vector<4x16xf32>
    %c0_15 = arith.constant 0 : index
    %c217 = arith.constant 217 : index
    %27 = vector.load %arg7[%c0_15, %c217] : memref<4x384xf32, #tpu.memory_space<vmem>>, vector<4x16xf32>
    tpu.vector_store %arg7[%c0_15, %c217], %26 {strides = array<i32>} : memref<4x384xf32, #tpu.memory_space<vmem>>, vector<4x16xf32>,
    %28 = vector.extract_strided_slice %3 {offsets = [0, 192], sizes = [4, 16], strides = [1, 1]} : vector<4x256xf32> to vector<4x16xf32>
    %c0_16 = arith.constant 0 : index
    %c235 = arith.constant 235 : index
    %29 = vector.load %arg7[%c0_16, %c235] : memref<4x384xf32, #tpu.memory_space<vmem>>, vector<4x16xf32>
    tpu.vector_store %arg7[%c0_16, %c235], %28 {strides = array<i32>} : memref<4x384xf32, #tpu.memory_space<vmem>>, vector<4x16xf32>,
    %30 = vector.extract_strided_slice %3 {offsets = [0, 208], sizes = [4, 16], strides = [1, 1]} : vector<4x256xf32> to vector<4x16xf32>
    %c0_17 = arith.constant 0 : index
    %c253 = arith.constant 253 : index
    %31 = vector.load %arg7[%c0_17, %c253] : memref<4x384xf32, #tpu.memory_space<vmem>>, vector<4x16xf32>
    tpu.vector_store %arg7[%c0_17, %c253], %30 {strides = array<i32>} : memref<4x384xf32, #tpu.memory_space<vmem>>, vector<4x16xf32>,
    %32 = vector.extract_strided_slice %3 {offsets = [0, 224], sizes = [4, 16], strides = [1, 1]} : vector<4x256xf32> to vector<4x16xf32>
    %c0_18 = arith.constant 0 : index
    %c271 = arith.constant 271 : index
    %33 = vector.load %arg7[%c0_18, %c271] : memref<4x384xf32, #tpu.memory_space<vmem>>, vector<4x16xf32>
    tpu.vector_store %arg7[%c0_18, %c271], %32 {strides = array<i32>} : memref<4x384xf32, #tpu.memory_space<vmem>>, vector<4x16xf32>,
    %34 = vector.extract_strided_slice %3 {offsets = [0, 240], sizes = [4, 16], strides = [1, 1]} : vector<4x256xf32> to vector<4x16xf32>
    %c0_19 = arith.constant 0 : index
    %c289 = arith.constant 289 : index
    %35 = vector.load %arg7[%c0_19, %c289] : memref<4x384xf32, #tpu.memory_space<vmem>>, vector<4x16xf32>
    tpu.vector_store %arg7[%c0_19, %c289], %34 {strides = array<i32>} : memref<4x384xf32, #tpu.memory_space<vmem>>, vector<4x16xf32>,
    %c0_20 = arith.constant 0 : index
    %c0_21 = arith.constant 0 : index
    %36 = vector.load %arg7[%c0_20, %c0_21] : memref<4x384xf32, #tpu.memory_space<vmem>>, vector<4x290xf32>
    %37 = vector.extract_strided_slice %36 {offsets = [0, 0], sizes = [4, 288], strides = [1, 1]} : vector<4x290xf32> to vector<4x288xf32>
    %c0_22 = arith.constant 0 : index
    %c0_23 = arith.constant 0 : index
    %c0_24 = arith.constant 0 : index
    %38 = vector.load %arg2[%c0_22, %c0_23, %c0_24] : memref<9x4x4xf32, #tpu.memory_space<vmem>>, vector<1x4x4xf32>
    %39 = vector.shape_cast %38 : vector<1x4x4xf32> to vector<4x4xf32>
    %cst_25 = arith.constant dense<0.000000e+00> : vector<4x288xf32>
    %40 = tpu.matmul %39, %37, %cst_25 {dimension_numbers = #tpu.dot_dimension_numbers<[1], [0], [0], [1], [0, 0, 1, 1], [], []>} : vector<4x4xf32>, vector<4x288xf32>, vector<4x288xf32> -> vector<4x288xf32>
    %41 = vector.extract_strided_slice %36 {offsets = [0, 1], sizes = [4, 288], strides = [1, 1]} : vector<4x290xf32> to vector<4x288xf32>
    %c1 = arith.constant 1 : index
    %c0_26 = arith.constant 0 : index
    %c0_27 = arith.constant 0 : index
    %42 = vector.load %arg2[%c1, %c0_26, %c0_27] : memref<9x4x4xf32, #tpu.memory_space<vmem>>, vector<1x4x4xf32>
    %43 = vector.shape_cast %42 : vector<1x4x4xf32> to vector<4x4xf32>
    %cst_28 = arith.constant dense<0.000000e+00> : vector<4x288xf32>
    %44 = tpu.matmul %43, %41, %cst_28 {dimension_numbers = #tpu.dot_dimension_numbers<[1], [0], [0], [1], [0, 0, 1, 1], [], []>} : vector<4x4xf32>, vector<4x288xf32>, vector<4x288xf32> -> vector<4x288xf32>
    %45 = arith.addf %40, %44 : vector<4x288xf32>
    %46 = vector.extract_strided_slice %36 {offsets = [0, 2], sizes = [4, 288], strides = [1, 1]} : vector<4x290xf32> to vector<4x288xf32>
    %c2 = arith.constant 2 : index
    %c0_29 = arith.constant 0 : index
    %c0_30 = arith.constant 0 : index
    %47 = vector.load %arg2[%c2, %c0_29, %c0_30] : memref<9x4x4xf32, #tpu.memory_space<vmem>>, vector<1x4x4xf32>
    %48 = vector.shape_cast %47 : vector<1x4x4xf32> to vector<4x4xf32>
    %cst_31 = arith.constant dense<0.000000e+00> : vector<4x288xf32>
    %49 = tpu.matmul %48, %46, %cst_31 {dimension_numbers = #tpu.dot_dimension_numbers<[1], [0], [0], [1], [0, 0, 1, 1], [], []>} : vector<4x4xf32>, vector<4x288xf32>, vector<4x288xf32> -> vector<4x288xf32>
    %50 = arith.addf %45, %49 : vector<4x288xf32>
    %c0_32 = arith.constant 0 : index
    %c18 = arith.constant 18 : index
    %51 = vector.load %arg7[%c0_32, %c18] : memref<4x384xf32, #tpu.memory_space<vmem>>, vector<4x290xf32>
    %52 = vector.extract_strided_slice %51 {offsets = [0, 0], sizes = [4, 288], strides = [1, 1]} : vector<4x290xf32> to vector<4x288xf32>
    %c3 = arith.constant 3 : index
    %c0_33 = arith.constant 0 : index
    %c0_34 = arith.constant 0 : index
    %53 = vector.load %arg2[%c3, %c0_33, %c0_34] : memref<9x4x4xf32, #tpu.memory_space<vmem>>, vector<1x4x4xf32>
    %54 = vector.shape_cast %53 : vector<1x4x4xf32> to vector<4x4xf32>
    %cst_35 = arith.constant dense<0.000000e+00> : vector<4x288xf32>
    %55 = tpu.matmul %54, %52, %cst_35 {dimension_numbers = #tpu.dot_dimension_numbers<[1], [0], [0], [1], [0, 0, 1, 1], [], []>} : vector<4x4xf32>, vector<4x288xf32>, vector<4x288xf32> -> vector<4x288xf32>
    %56 = arith.addf %50, %55 : vector<4x288xf32>
    %57 = vector.extract_strided_slice %51 {offsets = [0, 1], sizes = [4, 288], strides = [1, 1]} : vector<4x290xf32> to vector<4x288xf32>
    %c4 = arith.constant 4 : index
    %c0_36 = arith.constant 0 : index
    %c0_37 = arith.constant 0 : index
    %58 = vector.load %arg2[%c4, %c0_36, %c0_37] : memref<9x4x4xf32, #tpu.memory_space<vmem>>, vector<1x4x4xf32>
    %59 = vector.shape_cast %58 : vector<1x4x4xf32> to vector<4x4xf32>
    %cst_38 = arith.constant dense<0.000000e+00> : vector<4x288xf32>
    %60 = tpu.matmul %59, %57, %cst_38 {dimension_numbers = #tpu.dot_dimension_numbers<[1], [0], [0], [1], [0, 0, 1, 1], [], []>} : vector<4x4xf32>, vector<4x288xf32>, vector<4x288xf32> -> vector<4x288xf32>
    %61 = arith.addf %56, %60 : vector<4x288xf32>
    %62 = vector.extract_strided_slice %51 {offsets = [0, 2], sizes = [4, 288], strides = [1, 1]} : vector<4x290xf32> to vector<4x288xf32>
    %c5 = arith.constant 5 : index
    %c0_39 = arith.constant 0 : index
    %c0_40 = arith.constant 0 : index
    %63 = vector.load %arg2[%c5, %c0_39, %c0_40] : memref<9x4x4xf32, #tpu.memory_space<vmem>>, vector<1x4x4xf32>
    %64 = vector.shape_cast %63 : vector<1x4x4xf32> to vector<4x4xf32>
    %cst_41 = arith.constant dense<0.000000e+00> : vector<4x288xf32>
    %65 = tpu.matmul %64, %62, %cst_41 {dimension_numbers = #tpu.dot_dimension_numbers<[1], [0], [0], [1], [0, 0, 1, 1], [], []>} : vector<4x4xf32>, vector<4x288xf32>, vector<4x288xf32> -> vector<4x288xf32>
    %66 = arith.addf %61, %65 : vector<4x288xf32>
    %c0_42 = arith.constant 0 : index
    %c36 = arith.constant 36 : index
    %67 = vector.load %arg7[%c0_42, %c36] : memref<4x384xf32, #tpu.memory_space<vmem>>, vector<4x290xf32>
    %68 = vector.extract_strided_slice %67 {offsets = [0, 0], sizes = [4, 288], strides = [1, 1]} : vector<4x290xf32> to vector<4x288xf32>
    %c6 = arith.constant 6 : index
    %c0_43 = arith.constant 0 : index
    %c0_44 = arith.constant 0 : index
    %69 = vector.load %arg2[%c6, %c0_43, %c0_44] : memref<9x4x4xf32, #tpu.memory_space<vmem>>, vector<1x4x4xf32>
    %70 = vector.shape_cast %69 : vector<1x4x4xf32> to vector<4x4xf32>
    %cst_45 = arith.constant dense<0.000000e+00> : vector<4x288xf32>
    %71 = tpu.matmul %70, %68, %cst_45 {dimension_numbers = #tpu.dot_dimension_numbers<[1], [0], [0], [1], [0, 0, 1, 1], [], []>} : vector<4x4xf32>, vector<4x288xf32>, vector<4x288xf32> -> vector<4x288xf32>
    %72 = arith.addf %66, %71 : vector<4x288xf32>
    %73 = vector.extract_strided_slice %67 {offsets = [0, 1], sizes = [4, 288], strides = [1, 1]} : vector<4x290xf32> to vector<4x288xf32>
    %c7 = arith.constant 7 : index
    %c0_46 = arith.constant 0 : index
    %c0_47 = arith.constant 0 : index
    %74 = vector.load %arg2[%c7, %c0_46, %c0_47] : memref<9x4x4xf32, #tpu.memory_space<vmem>>, vector<1x4x4xf32>
    %75 = vector.shape_cast %74 : vector<1x4x4xf32> to vector<4x4xf32>
    %cst_48 = arith.constant dense<0.000000e+00> : vector<4x288xf32>
    %76 = tpu.matmul %75, %73, %cst_48 {dimension_numbers = #tpu.dot_dimension_numbers<[1], [0], [0], [1], [0, 0, 1, 1], [], []>} : vector<4x4xf32>, vector<4x288xf32>, vector<4x288xf32> -> vector<4x288xf32>
    %77 = arith.addf %72, %76 : vector<4x288xf32>
    %78 = vector.extract_strided_slice %67 {offsets = [0, 2], sizes = [4, 288], strides = [1, 1]} : vector<4x290xf32> to vector<4x288xf32>
    %c8 = arith.constant 8 : index
    %c0_49 = arith.constant 0 : index
    %c0_50 = arith.constant 0 : index
    %79 = vector.load %arg2[%c8, %c0_49, %c0_50] : memref<9x4x4xf32, #tpu.memory_space<vmem>>, vector<1x4x4xf32>
    %80 = vector.shape_cast %79 : vector<1x4x4xf32> to vector<4x4xf32>
    %cst_51 = arith.constant dense<0.000000e+00> : vector<4x288xf32>
    %81 = tpu.matmul %80, %78, %cst_51 {dimension_numbers = #tpu.dot_dimension_numbers<[1], [0], [0], [1], [0, 0, 1, 1], [], []>} : vector<4x4xf32>, vector<4x288xf32>, vector<4x288xf32> -> vector<4x288xf32>
    %82 = arith.addf %77, %81 : vector<4x288xf32>
    %c0_52 = arith.constant 0 : index
    %c0_53 = arith.constant 0 : index
    %83 = vector.load %arg3[%c0_52, %c0_53] : memref<4x1xf32, #tpu.memory_space<vmem>>, vector<4x1xf32>
    %84 = vector.broadcast %83 : vector<4x1xf32> to vector<4x288xf32>
    %85 = arith.addf %82, %84 : vector<4x288xf32>
    %cst_54 = arith.constant 0.000000e+00 : f32
    %86 = vector.broadcast %cst_54 : f32 to vector<4x288xf32>
    %87 = arith.maximumf %85, %86 : vector<4x288xf32>
    %c0_55 = arith.constant 0 : index
    %c0_56 = arith.constant 0 : index
    %88 = vector.load %arg4[%c0_55, %c0_56] : memref<8x4xf32, #tpu.memory_space<vmem>>, vector<8x4xf32>
    %cst_57 = arith.constant dense<0.000000e+00> : vector<8x288xf32>
    %89 = tpu.matmul %88, %87, %cst_57 {dimension_numbers = #tpu.dot_dimension_numbers<[1], [0], [0], [1], [0, 0, 1, 1], [], []>} : vector<8x4xf32>, vector<4x288xf32>, vector<8x288xf32> -> vector<8x288xf32>
    %c0_58 = arith.constant 0 : index
    %c0_59 = arith.constant 0 : index
    %90 = vector.load %arg5[%c0_58, %c0_59] : memref<8x1xf32, #tpu.memory_space<vmem>>, vector<8x1xf32>
    %91 = vector.broadcast %90 : vector<8x1xf32> to vector<8x288xf32>
    %92 = arith.addf %89, %91 : vector<8x288xf32>
    %93 = arith.truncf %92 : vector<8x288xf32> to vector<8x288xbf16>
    %c0_60 = arith.constant 0 : index
    %c0_61 = arith.constant 0 : index
    %c0_62 = arith.constant 0 : index
    %94 = vector.load %arg6[%c0_60, %c0_61, %c0_62] : memref<1x8x288xbf16, #tpu.memory_space<vmem>>, vector<1x8x288xbf16>
    %95 = vector.shape_cast %94 : vector<1x8x288xbf16> to vector<8x288xbf16>
    %96 = vector.shape_cast %93 : vector<8x288xbf16> to vector<1x8x288xbf16>
    tpu.vector_store %arg6[%c0_60, %c0_61, %c0_62], %96 {strides = array<i32>} : memref<1x8x288xbf16, #tpu.memory_space<vmem>>, vector<1x8x288xbf16>,
    return
  }
  func.func @transform_0(%arg0: i32) -> (i32, i32, i32) {
    %c0_i32 = arith.constant 0 : i32
    %c0_i32_0 = arith.constant 0 : i32
    %c0_i32_1 = arith.constant 0 : i32
    return %arg0, %c0_i32, %c0_i32_0 : i32, i32, i32
  }
  func.func @transform_1(%arg0: i32) -> (i32, i32, i32) {
    %c0_i32 = arith.constant 0 : i32
    %c0_i32_0 = arith.constant 0 : i32
    %c0_i32_1 = arith.constant 0 : i32
    %c0_i32_2 = arith.constant 0 : i32
    return %c0_i32, %c0_i32_0, %c0_i32_1 : i32, i32, i32
  }
  func.func @transform_2(%arg0: i32) -> (i32, i32) {
    %c0_i32 = arith.constant 0 : i32
    %c0_i32_0 = arith.constant 0 : i32
    %c0_i32_1 = arith.constant 0 : i32
    return %c0_i32, %c0_i32_0 : i32, i32
  }
  func.func @transform_3(%arg0: i32) -> (i32, i32) {
    %c0_i32 = arith.constant 0 : i32
    %c0_i32_0 = arith.constant 0 : i32
    %c0_i32_1 = arith.constant 0 : i32
    return %c0_i32, %c0_i32_0 : i32, i32
  }
  func.func @transform_4(%arg0: i32) -> (i32, i32) {
    %c0_i32 = arith.constant 0 : i32
    %c0_i32_0 = arith.constant 0 : i32
    %c0_i32_1 = arith.constant 0 : i32
    return %c0_i32, %c0_i32_0 : i32, i32
  }
  func.func @transform_5(%arg0: i32) -> (i32, i32, i32) {
    %c0_i32 = arith.constant 0 : i32
    %c0_i32_0 = arith.constant 0 : i32
    %c0_i32_1 = arith.constant 0 : i32
    return %arg0, %c0_i32, %c0_i32_0 : i32, i32, i32
  }
}

</mosaic_0001>

<llo_original>
// kernel: anchor_free_forward.1
$region0: #{anchor_free_forward.1}
  #allocation0 [shape = 'u32[]', space=smem, size = 0x4, offset = 0x4, fixed_abs, tag = 'smem constant byte address 0x4 - core index']
  #allocation1 [shape = 'u32[72,128]{1,0:T(1,128)}', space=vmem, size = 0x9000, scoped, tag = 'internal scratch']
  #allocation2 [shape = 'f32[4,384]{1,0:T(4,128)}', space=vmem, size = 0x1800, scoped, tag = 'scratch operand']
  %s0 = inlined_call_operand.vmem [shape: f32[2,4,256], index: 0, kind: input, shape index: {}]
  %s1 = inlined_call_operand.vmem [shape: f32[9,4,4], index: 1, kind: input, shape index: {}]
  %s2 = inlined_call_operand.vmem [shape: f32[4,1], index: 2, kind: input, shape index: {}]
  %s3 = inlined_call_operand.vmem [shape: f32[8,4], index: 3, kind: input, shape index: {}]
  %s4 = inlined_call_operand.vmem [shape: f32[8,1], index: 4, kind: input, shape index: {}]
  %s5 = inlined_call_operand.vmem [shape: bf16[2,8,288], index: 5, kind: output, shape index: {}]
  %s6 = sld [smem:[#allocation0]]
  $region53: #{anchor_free_forward.1} parent=0
    _
  %s8 = ssub.s32 1, %s6
  %s9 = scalar_select 0, %s8, %s6
  loop: start=0, step=1, limit=4
  $region2: #{anchor_free_forward.1} parent=0 // loop_pre_header
    _
  $region3: #{anchor_free_forward.1} parent=0 // loop_header
    %s11 = sphi 0, %s15
    %p12 = scmp.ge.s32.totalorder %s11, 4
    %s21 = sphi 0, %s23
    %s24 = sphi 0, %s21
    %s25 = sphi 0, %s24
    %s41 = sphi 0, %s25
    %s45 = sphi 0, %s45
    %s47 = sphi 0, %s45
    %s48 = sphi 0, %s47
    %s62 = sphi 0, %s48
    %s66 = sphi 0, %s66
    %s68 = sphi 0, %s66
    %s69 = sphi 0, %s68
    %s83 = sphi 0, %s69
    %s87 = sphi 0, %s87
    %s89 = sphi 0, %s87
    %s90 = sphi 0, %s89
    %s104 = sphi 0, %s90
    %s108 = sphi 0, %s108
    %s110 = sphi 0, %s108
    %s111 = sphi 0, %s110
    %s125 = sphi 0, %s111
    %s131 = sphi 0, %s133
    %s134 = sphi 0, %s131
    %s135 = sphi 0, %s134
    %s151 = sphi 0, %s135
  $region4: #{anchor_free_forward.1} parent=0 // loop_header_branch
    %14 = sbr.rel (%p12) target = $region8
  $region5: #{anchor_free_forward.1} parent=0 // loop_body
    %s16 = ssub.s32 %s11, 1
    %s17 = ssub.s32 %s11, 2
    %s18 = sadd.s32 %s11, 1
    %s19 = ssub.s32 %s11, %s18
    %p20 = scmp.eq.s32.totalorder %s19, 0
    %s22 = sadd.s32 %s21, 1
    %s23 = scalar_select %p20, %s21, %s22
    %p26 = pneg %p20
    %p27 = scmp.eq.s32.totalorder %s11, 1
    %p28 = por %p26, %p27
    %p29 = scmp.ne.s32.totalorder %s21, %s24
    %p30 = scmp.eq.s32.totalorder %s11, 0
    %p31 = por %p29, %p30
    %p32 = scmp.ne.s32.totalorder %s21, %s24
    %p33 = scmp.eq.s32.totalorder %s16, 1
    %p34 = por %p32, %p33
    %p35 = scmp.ne.s32.totalorder %s24, %s25
    %p36 = scmp.eq.s32.totalorder %s16, 0
    %p37 = por %p35, %p36
    %p38 = scmp.ne.s32.totalorder %s24, %s25
    %p39 = scmp.eq.s32.totalorder %s17, 1
    %p40 = por %p38, %p39
    %p42 = scmp.ne.s32.totalorder %s25, %s41
    %p43 = scmp.eq.s32.totalorder %s17, 0
    %p44 = por %p42, %p43
    %s46 = sadd.s32 %s45, 1
    %p49 = scmp.eq.s32.totalorder %s11, 1
    %p50 = scmp.ne.s32.totalorder %s45, %s47
    %p51 = scmp.eq.s32.totalorder %s11, 0
    %p52 = por %p50, %p51
    %p53 = scmp.ne.s32.totalorder %s45, %s47
    %p54 = scmp.eq.s32.totalorder %s16, 1
    %p55 = por %p53, %p54
    %p56 = scmp.ne.s32.totalorder %s47, %s48
    %p57 = scmp.eq.s32.totalorder %s16, 0
    %p58 = por %p56, %p57
    %p59 = scmp.ne.s32.totalorder %s47, %s48
    %p60 = scmp.eq.s32.totalorder %s17, 1
    %p61 = por %p59, %p60
    %p63 = scmp.ne.s32.totalorder %s48, %s62
    %p64 = scmp.eq.s32.totalorder %s17, 0
    %p65 = por %p63, %p64
    %s67 = sadd.s32 %s66, 1
    %p70 = scmp.eq.s32.totalorder %s11, 1
    %p71 = scmp.ne.s32.totalorder %s66, %s68
    %p72 = scmp.eq.s32.totalorder %s11, 0
    %p73 = por %p71, %p72
    %p74 = scmp.ne.s32.totalorder %s66, %s68
    %p75 = scmp.eq.s32.totalorder %s16, 1
    %p76 = por %p74, %p75
    %p77 = scmp.ne.s32.totalorder %s68, %s69
    %p78 = scmp.eq.s32.totalorder %s16, 0
    %p79 = por %p77, %p78
    %p80 = scmp.ne.s32.totalorder %s68, %s69
    %p81 = scmp.eq.s32.totalorder %s17, 1
    %p82 = por %p80, %p81
    %p84 = scmp.ne.s32.totalorder %s69, %s83
    %p85 = scmp.eq.s32.totalorder %s17, 0
    %p86 = por %p84, %p85
    %s88 = sadd.s32 %s87, 1
    %p91 = scmp.eq.s32.totalorder %s11, 1
    %p92 = scmp.ne.s32.totalorder %s87, %s89
    %p93 = scmp.eq.s32.totalorder %s11, 0
    %p94 = por %p92, %p93
    %p95 = scmp.ne.s32.totalorder %s87, %s89
    %p96 = scmp.eq.s32.totalorder %s16, 1
    %p97 = por %p95, %p96
    %p98 = scmp.ne.s32.totalorder %s89, %s90
    %p99 = scmp.eq.s32.totalorder %s16, 0
    %p100 = por %p98, %p99
    %p101 = scmp.ne.s32.totalorder %s89, %s90
    %p102 = scmp.eq.s32.totalorder %s17, 1
    %p103 = por %p101, %p102
    %p105 = scmp.ne.s32.totalorder %s90, %s104
    %p106 = scmp.eq.s32.totalorder %s17, 0
    %p107 = por %p105, %p106
    %s109 = sadd.s32 %s108, 1
    %p112 = scmp.eq.s32.totalorder %s11, 1
    %p113 = scmp.ne.s32.totalorder %s108, %s110
    %p114 = scmp.eq.s32.totalorder %s11, 0
    %p115 = por %p113, %p114
    %p116 = scmp.ne.s32.totalorder %s108, %s110
    %p117 = scmp.eq.s32.totalorder %s16, 1
    %p118 = por %p116, %p117
    %p119 = scmp.ne.s32.totalorder %s110, %s111
    %p120 = scmp.eq.s32.totalorder %s16, 0
    %p121 = por %p119, %p120
    %p122 = scmp.ne.s32.totalorder %s110, %s111
    %p123 = scmp.eq.s32.totalorder %s17, 1
    %p124 = por %p122, %p123
    %p126 = scmp.ne.s32.totalorder %s111, %s125
    %p127 = scmp.eq.s32.totalorder %s17, 0
    %p128 = por %p126, %p127
    %s129 = ssub.s32 %s11, %s18
    %p130 = scmp.eq.s32.totalorder %s129, 0
    %s132 = sadd.s32 %s131, 1
    %s133 = scalar_select %p130, %s131, %s132
    %p136 = pneg %p130
    %p137 = scmp.eq.s32.totalorder %s11, 1
    %p138 = por %p136, %p137
    %p139 = scmp.ne.s32.totalorder %s131, %s134
    %p140 = scmp.eq.s32.totalorder %s11, 0
    %p141 = por %p139, %p140
    %p142 = scmp.ne.s32.totalorder %s131, %s134
    %p143 = scmp.eq.s32.totalorder %s16, 1
    %p144 = por %p142, %p143
    %p145 = scmp.ne.s32.totalorder %s134, %s135
    %p146 = scmp.eq.s32.totalorder %s16, 0
    %p147 = por %p145, %p146
    %p148 = scmp.ne.s32.totalorder %s134, %s135
    %p149 = scmp.eq.s32.totalorder %s17, 1
    %p150 = por %p148, %p149
    %p152 = scmp.ne.s32.totalorder %s135, %s151
    %p153 = scmp.eq.s32.totalorder %s17, 0
    %p154 = por %p152, %p153
    %p155 = scmp.le.s32.totalorder 1, %s11
    %p156 = scmp.lt.s32.totalorder %s11, 3
    %p157 = pnand %p155, %p156
    %p158 = pneg %p157
    // Predicated region
    $region9: #{anchor_free_forward.1} parent=5 // pred_check
      _
    $region10: #{anchor_free_forward.1} parent=5 // pred_check_branch
      %160 = sbr.rel (%p157) target = $region12
    $region11: #{anchor_free_forward.1} parent=5 // pred_region
      %s161 = ssub.s32 %s11, 1
      // Predicated region
      $region13: #{anchor_free_forward.1} parent=11 // pred_check
        %p162 = pneg %p58
      $region14: #{anchor_free_forward.1} parent=11 // pred_check_branch
        %164 = sbr.rel (%p162) target = $region16
      $region15: #{anchor_free_forward.1} parent=11 // pred_region
        _
      $region16: #{anchor_free_forward.1} parent=11 // pred_fallthru
        _
      // Predicated region
      $region17: #{anchor_free_forward.1} parent=11 // pred_check
        %p165 = pneg %p79
      $region18: #{anchor_free_forward.1} parent=11 // pred_check_branch
        %167 = sbr.rel (%p165) target = $region20
      $region19: #{anchor_free_forward.1} parent=11 // pred_region
        _
      $region20: #{anchor_free_forward.1} parent=11 // pred_fallthru
        _
      // Predicated region
      $region21: #{anchor_free_forward.1} parent=11 // pred_check
        %p168 = pneg %p100
      $region22: #{anchor_free_forward.1} parent=11 // pred_check_branch
        %170 = sbr.rel (%p168) target = $region24
      $region23: #{anchor_free_forward.1} parent=11 // pred_region
        _
      $region24: #{anchor_free_forward.1} parent=11 // pred_fallthru
        _
      // Predicated region
      $region25: #{anchor_free_forward.1} parent=11 // pred_check
        %p171 = pneg %p121
      $region26: #{anchor_free_forward.1} parent=11 // pred_check_branch
        %173 = sbr.rel (%p171) target = $region28
      $region27: #{anchor_free_forward.1} parent=11 // pred_region
        _
      $region28: #{anchor_free_forward.1} parent=11 // pred_fallthru
        _
    $region12: #{anchor_free_forward.1} parent=5 // pred_fallthru
      _
    %p174 = scmp.lt.s32.totalorder %s11, 2
    // Predicated region
    $region29: #{anchor_free_forward.1} parent=5 // pred_check
      %p175 = pneg %p174
    $region30: #{anchor_free_forward.1} parent=5 // pred_check_branch
      %177 = sbr.rel (%p175) target = $region32
    $region31: #{anchor_free_forward.1} parent=5 // pred_region
      // Predicated region
      $region33: #{anchor_free_forward.1} parent=31 // pred_check
        %p178 = pneg %p31
      $region34: #{anchor_free_forward.1} parent=31 // pred_check_branch
        %180 = sbr.rel (%p178) target = $region36
      $region35: #{anchor_free_forward.1} parent=31 // pred_region
        %p181 = scmp.lt.s32.totalorder %s11, 1
        %s182 = scalar_select %p181, %s11, 1
        %s183 = smul.addr %s182, 2
        %s184 = smul.addr %s183, 4
        %s185 = scalar_lea.vmem %s0, %s184
      $region36: #{anchor_free_forward.1} parent=31 // pred_fallthru
        _
    $region32: #{anchor_free_forward.1} parent=5 // pred_fallthru
      _
    %p186 = scmp.le.s32.totalorder 1, %s11
    %p187 = scmp.lt.s32.totalorder %s11, 3
    %p188 = pnand %p186, %p187
    %p189 = pneg %p188
    // Predicated region
    $region37: #{anchor_free_forward.1} parent=5 // pred_check
      _
    $region38: #{anchor_free_forward.1} parent=5 // pred_check_branch
      %191 = sbr.rel (%p188) target = $region40
    $region39: #{anchor_free_forward.1} parent=5 // pred_region
      %s192 = ssub.s32 %s11, 1
      %p193 = scmp.lt.s32.totalorder %s16, 1
      %s194 = scalar_select %p193, %s16, 1
      %s195 = smul.addr %s194, 2
      %s196 = smul.addr %s195, 4
      %s197 = scalar_lea.vmem %s0, %s196
      %p198 = pneg %p37
      %p199 = pneg %p34
      %p200 = pneg %p58
      %p201 = pneg %p55
      %p202 = pneg %p79
      %p203 = pneg %p76
      %p204 = pneg %p100
      %p205 = pneg %p97
      %p206 = pneg %p121
      %p207 = pneg %p118
      %p208 = pneg %p147
      %p209 = pneg %p144
      %p210 = scmp.lt.s32.totalorder %s16, 1
      %s211 = scalar_select %p210, %s16, 1
      %s212 = smul.addr %s211, 3
      %s213 = smul.addr %s212, 4
      %s214 = scalar_lea.vmem %s5, %s213
      %p215 = scmp.lt.s32.totalorder %s16, 1
      %s216 = scalar_select %p215, %s16, 1
      %s217 = smul.addr %s216, 2
      %s218 = smul.addr %s217, 4
      %s219 = scalar_lea.vmem %s0, %s218
      %p220 = scmp.lt.s32.totalorder %s16, 1
      %s221 = scalar_select %p220, %s16, 1
      %s222 = smul.addr %s221, 3
      %s223 = smul.addr %s222, 4
      %s224 = scalar_lea.vmem %s5, %s223
      %225 = vst [vmem:[#allocation2] sm:$0xff] 0.0
      %226 = vst [vmem:[#allocation2 + $0x8] sm:$0xf] 0.0
      %v227 = vld [vmem:[%s219] sm:$0xff]
      %229 = vrot.lane.b32.xlu0 %v227, 19
      %v230 = vpop.permute.xlu0 %229
      %vm232 = vcmask 281752
      %233 = vst.msk [vmem:[#allocation2] sm:$0xf] %vm232, %v230
      %234 = vrot.lane.b32.xlu0 %v227, 21
      %v235 = vpop.permute.xlu0 %234
      %vm237 = vcmask 429352
      %238 = vst.msk [vmem:[#allocation2] sm:$0xf] %vm237, %v235
      %239 = vrot.lane.b32.xlu0 %v227, 23
      %v240 = vpop.permute.xlu0 %239
      %vm242 = vcmask 576952
      %243 = vst.msk [vmem:[#allocation2] sm:$0xf] %vm242, %v240
      %244 = vrot.lane.b32.xlu0 %v227, 25
      %v245 = vpop.permute.xlu0 %244
      %vm247 = vcmask 724552
      %248 = vst.msk [vmem:[#allocation2] sm:$0xf] %vm247, %v245
      %249 = vrot.lane.b32.xlu0 %v227, 27
      %v250 = vpop.permute.xlu0 %249
      %vm252 = vcmask 872152
      %253 = vst.msk [vmem:[#allocation2] sm:$0xf] %vm252, %v250
      %254 = vrot.lane.b32.xlu0 %v227, 29
      %v255 = vpop.permute.xlu0 %254
      %vm257 = vcmask 1019752
      %258 = vst.msk [vmem:[#allocation2] sm:$0xf] %vm257, %v255
      %259 = vrot.lane.b32.xlu0 %v227, 31
      %v260 = vpop.permute.xlu0 %259
      %v261 = vrot.slane %v260, 4
      %vm262 = vcmask 252928
      %v263 = vsel %vm262, %v261, %v260
      %vm265 = vcmask 1044472
      %vm266 = vcmask 121860
      %vm267 = vmor %vm266, %vm265
      %268 = vst.msk [vmem:[#allocation2] sm:$0xff] %vm267, %v263
      %269 = vrot.lane.b32.xlu0 %v227, 33
      %v270 = vpop.permute.xlu0 %269
      %vm272 = vcmask 265352
      %273 = vst.msk [vmem:[#allocation2 + $0x4] sm:$0xf] %vm272, %v270
      %274 = vrot.lane.b32.xlu0 %v227, 35
      %v275 = vpop.permute.xlu0 %274
      %v276 = vrot.slane %v275, 4
      %vm277 = vcmask 285696
      %v278 = vsel %vm277, %v275, %v276
      %vm280 = vcmask 412952
      %281 = vst.msk [vmem:[#allocation2 + $0x4] sm:$0xf] %vm280, %v278
      %282 = vrot.lane.b32.xlu0 %v227, 37
      %v283 = vpop.permute.xlu0 %282
      %v284 = vrot.slane %v283, 4
      %vm285 = vcmask 302080
      %v286 = vsel %vm285, %v283, %v284
      %vm288 = vcmask 560552
      %289 = vst.msk [vmem:[#allocation2 + $0x4] sm:$0xf] %vm288, %v286
      %290 = vrot.lane.b32.xlu0 %v227, 39
      %v291 = vpop.permute.xlu0 %290
      %v292 = vrot.slane %v291, 4
      %vm293 = vcmask 318464
      %v294 = vsel %vm293, %v291, %v292
      %vm296 = vcmask 708152
      %297 = vst.msk [vmem:[#allocation2 + $0x4] sm:$0xf] %vm296, %v294
      %298 = vrot.lane.b32.xlu0 %v227, 41
      %v299 = vpop.permute.xlu0 %298
      %v300 = vrot.slane %v299, 4
      %vm301 = vcmask 334848
      %v302 = vsel %vm301, %v299, %v300
      %vm304 = vcmask 855752
      %305 = vst.msk [vmem:[#allocation2 + $0x4] sm:$0xf] %vm304, %v302
      %306 = vrot.lane.b32.xlu0 %v227, 43
      %v307 = vpop.permute.xlu0 %306
      %v308 = vrot.slane %v307, 4
      %vm309 = vcmask 351232
      %v310 = vsel %vm309, %v307, %v308
      %vm312 = vcmask 1003352
      %313 = vst.msk [vmem:[#allocation2 + $0x4] sm:$0xf] %vm312, %v310
      %314 = vrot.lane.b32.xlu0 %v227, 45
      %v315 = vpop.permute.xlu0 %314
      %v316 = vrot.slane %v315, 4
      %vm317 = vcmask 367616
      %v318 = vsel %vm317, %v315, %v316
      %vm320 = vcmask 1044456
      %vm321 = vcmask 105476
      %vm322 = vmor %vm321, %vm320
      %323 = vst.msk [vmem:[#allocation2 + $0x4] sm:$0xff] %vm322, %v318
      %324 = vrot.lane.b32.xlu0 %v227, 47
      %v325 = vpop.permute.xlu0 %324
      %v326 = vrot.slane %v325, 4
      %vm328 = vcmask 248952
      %329 = vst.msk [vmem:[#allocation2 + $0x8] sm:$0xf] %vm328, %v326
      %330 = vrot.lane.b32.xlu0 %v227, 49
      %v331 = vpop.permute.xlu0 %330
      %v332 = vrot.slane %v331, 4
      %vm334 = vcmask 396552
      %335 = vst.msk [vmem:[#allocation2 + $0x8] sm:$0xf] %vm334, %v332
      %v336 = vld [vmem:[#allocation2] sm:$0xff]
      %v337 = vld [vmem:[#allocation2 + $0x8] sm:$0xf]
      %v338 = vld [vmem:[%s1] sm:$0xf]
      %s339 = scalar_lea.vmem %s1, 4
      %v340 = vld [vmem:[%s339] sm:$0xf]
      %343 = vst [vmem:[#allocation1] ss:$2 sm:$0xff] %v336
      %s344 = scalar_lea.vmem [#allocation1], 16
      %345 = vst [vmem:[%s344] ss:$2 sm:$0xff] %v337
      %v346 = vld.sshfl [vmem:[#allocation1] sm:$0xff pattern:$0x75316420]
      %v347 = vld.sshfl [vmem:[#allocation1 + $0x8] sm:$0xff pattern:$0x75316420]
      %v348 = vld.sshfl [vmem:[#allocation1 + $0x10] sm:$0xff pattern:$0x75316420]
      %349 = vrot.lane.b32.xlu0 %v346, 127
      %v350 = vpop.permute.xlu0 %349
      %351 = vrot.lane.b32.xlu0 %v347, 127
      %v352 = vpop.permute.xlu0 %351
      %353 = vrot.lane.b32.xlu0 %v348, 127
      %v354 = vpop.permute.xlu0 %353
      %vm355 = vcmask 1039360
      %v356 = vsel %vm355, %v350, %v352
      %v357 = vsel %vm355, %v352, %v354
      %vm358 = vcmask 31744
      %v360 = vsel %vm358, %v340, 0
      %vm362 = vcmask 1043456
      %v363 = vsel %vm362, %v356, 0
      %v365 = vsel %vm362, %v357, 0
      %v367 = vsel %vm362, %v354, 0
      %369 = vmatpush.msra.mxu0 0.0
      %370 = vmatpush.msra.mxu0 0.0
      %371 = vmatpush.msra.mxu0 0.0
      %372 = vmatpush.msra.mxu0 0.0
      %373 = vmatpush.msra.mxu0 0.0
      %374 = vmatpush.msra.mxu0 0.0
      %375 = vmatpush.msra.mxu0 0.0
      %376 = vmatpush.msra.mxu0 0.0
      %377 = vmatpush.msra.mxu0 0.0
      %378 = vmatpush.msra.mxu0 0.0
      %379 = vmatpush.msra.mxu0 0.0
      %380 = vmatpush.msra.mxu0 0.0
      %381 = vmatpush.msra.mxu0 0.0
      %382 = vmatpush.msra.mxu0 0.0
      %383 = vmatpush.msra.mxu0 0.0
      %384 = vmatpush.msra.mxu0 %v363
      %385 = vmatmul.f32.gmra.mxu0 %v360
      %v386 = vpop.f32.mrf.mxu0
      %v387 = vadd.f32 0.0, %v386
      %388 = vdwg.mxu0
      %389 = vmatpush.msra.mxu0 0.0
      %390 = vmatpush.msra.mxu0 0.0
      %391 = vmatpush.msra.mxu0 0.0
      %392 = vmatpush.msra.mxu0 0.0
      %393 = vmatpush.msra.mxu0 0.0
      %394 = vmatpush.msra.mxu0 0.0
      %395 = vmatpush.msra.mxu0 0.0
      %396 = vmatpush.msra.mxu0 0.0
      %397 = vmatpush.msra.mxu0 0.0
      %398 = vmatpush.msra.mxu0 0.0
      %399 = vmatpush.msra.mxu0 0.0
      %400 = vmatpush.msra.mxu0 0.0
      %401 = vmatpush.msra.mxu0 0.0
      %402 = vmatpush.msra.mxu0 0.0
      %403 = vmatpush.msra.mxu0 0.0
      %404 = vmatpush.msra.mxu0 %v365
      %405 = vmatmul.f32.gmra.mxu0 %v360
      %v406 = vpop.f32.mrf.mxu0
      %v407 = vadd.f32 0.0, %v406
      %408 = vdwg.mxu0
      %409 = vmatpush.msra.mxu0 0.0
      %410 = vmatpush.msra.mxu0 0.0
      %411 = vmatpush.msra.mxu0 0.0
      %412 = vmatpush.msra.mxu0 0.0
      %413 = vmatpush.msra.mxu0 0.0
      %414 = vmatpush.msra.mxu0 0.0
      %415 = vmatpush.msra.mxu0 0.0
      %416 = vmatpush.msra.mxu0 0.0
      %417 = vmatpush.msra.mxu0 0.0
      %418 = vmatpush.msra.mxu0 0.0
      %419 = vmatpush.msra.mxu0 0.0
      %420 = vmatpush.msra.mxu0 0.0
      %421 = vmatpush.msra.mxu0 0.0
      %422 = vmatpush.msra.mxu0 0.0
      %423 = vmatpush.msra.mxu0 0.0
      %424 = vmatpush.msra.mxu0 %v367
      %425 = vmatmul.f32.gmra.mxu0 %v360
      %v426 = vpop.f32.mrf.mxu0
      %v427 = vadd.f32 0.0, %v426
      %428 = vdwg.mxu0
      %429 = vst [vmem:[#allocation1] ss:$2 sm:$0xff] %v336
      %s430 = scalar_lea.vmem [#allocation1], 16
      %431 = vst [vmem:[%s430] ss:$2 sm:$0xff] %v337
      %v432 = vld.sshfl [vmem:[#allocation1] sm:$0xff pattern:$0x75316420]
      %v433 = vld.sshfl [vmem:[#allocation1 + $0x8] sm:$0xff pattern:$0x75316420]
      %v434 = vld.sshfl [vmem:[#allocation1 + $0x10] sm:$0xff pattern:$0x75316420]
      %v436 = vsel %vm358, %v338, 0
      %v438 = vsel %vm362, %v432, 0
      %v440 = vsel %vm362, %v433, 0
      %v442 = vsel %vm362, %v434, 0
      %444 = vmatpush.msra.mxu0 0.0
      %445 = vmatpush.msra.mxu0 0.0
      %446 = vmatpush.msra.mxu0 0.0
      %447 = vmatpush.msra.mxu0 0.0
      %448 = vmatpush.msra.mxu0 0.0
      %449 = vmatpush.msra.mxu0 0.0
      %450 = vmatpush.msra.mxu0 0.0
      %451 = vmatpush.msra.mxu0 0.0
      %452 = vmatpush.msra.mxu0 0.0
      %453 = vmatpush.msra.mxu0 0.0
      %454 = vmatpush.msra.mxu0 0.0
      %455 = vmatpush.msra.mxu0 0.0
      %456 = vmatpush.msra.mxu0 0.0
      %457 = vmatpush.msra.mxu0 0.0
      %458 = vmatpush.msra.mxu0 0.0
      %459 = vmatpush.msra.mxu0 %v438
      %460 = vmatmul.f32.gmra.mxu0 %v436
      %v461 = vpop.f32.mrf.mxu0
      %v462 = vadd.f32 %v387, %v461
      %463 = vdwg.mxu0
      %464 = vmatpush.msra.mxu0 0.0
      %465 = vmatpush.msra.mxu0 0.0
      %466 = vmatpush.msra.mxu0 0.0
      %467 = vmatpush.msra.mxu0 0.0
      %468 = vmatpush.msra.mxu0 0.0
      %469 = vmatpush.msra.mxu0 0.0
      %470 = vmatpush.msra.mxu0 0.0
      %471 = vmatpush.msra.mxu0 0.0
      %472 = vmatpush.msra.mxu0 0.0
      %473 = vmatpush.msra.mxu0 0.0
      %474 = vmatpush.msra.mxu0 0.0
      %475 = vmatpush.msra.mxu0 0.0
      %476 = vmatpush.msra.mxu0 0.0
      %477 = vmatpush.msra.mxu0 0.0
      %478 = vmatpush.msra.mxu0 0.0
      %479 = vmatpush.msra.mxu0 %v440
      %480 = vmatmul.f32.gmra.mxu0 %v436
      %v481 = vpop.f32.mrf.mxu0
      %v482 = vadd.f32 %v407, %v481
      %483 = vdwg.mxu0
      %484 = vmatpush.msra.mxu0 0.0
      %485 = vmatpush.msra.mxu0 0.0
      %486 = vmatpush.msra.mxu0 0.0
      %487 = vmatpush.msra.mxu0 0.0
      %488 = vmatpush.msra.mxu0 0.0
      %489 = vmatpush.msra.mxu0 0.0
      %490 = vmatpush.msra.mxu0 0.0
      %491 = vmatpush.msra.mxu0 0.0
      %492 = vmatpush.msra.mxu0 0.0
      %493 = vmatpush.msra.mxu0 0.0
      %494 = vmatpush.msra.mxu0 0.0
      %495 = vmatpush.msra.mxu0 0.0
      %496 = vmatpush.msra.mxu0 0.0
      %497 = vmatpush.msra.mxu0 0.0
      %498 = vmatpush.msra.mxu0 0.0
      %499 = vmatpush.msra.mxu0 %v442
      %500 = vmatmul.f32.gmra.mxu0 %v436
      %v501 = vpop.f32.mrf.mxu0
      %v502 = vadd.f32 %v427, %v501
      %503 = vdwg.mxu0
      %s504 = scalar_lea.vmem %s1, 8
      %v505 = vld [vmem:[%s504] sm:$0xf]
      %506 = vst [vmem:[#allocation1] ss:$2 sm:$0xff] %v336
      %s507 = scalar_lea.vmem [#allocation1], 16
      %508 = vst [vmem:[%s507] ss:$2 sm:$0xff] %v337
      %v509 = vld.sshfl [vmem:[#allocation1] sm:$0xff pattern:$0x75316420]
      %v510 = vld.sshfl [vmem:[#allocation1 + $0x8] sm:$0xff pattern:$0x75316420]
      %v511 = vld.sshfl [vmem:[#allocation1 + $0x10] sm:$0xff pattern:$0x75316420]
      %512 = vrot.lane.b32.xlu0 %v509, 126
      %v513 = vpop.permute.xlu0 %512
      %514 = vrot.lane.b32.xlu0 %v510, 126
      %v515 = vpop.permute.xlu0 %514
      %516 = vrot.lane.b32.xlu0 %v511, 126
      %v517 = vpop.permute.xlu0 %516
      %vm518 = vcmask 1031168
      %v519 = vsel %vm518, %v513, %v515
      %v520 = vsel %vm518, %v515, %v517
      %v522 = vsel %vm358, %v505, 0
      %v524 = vsel %vm362, %v519, 0
      %v526 = vsel %vm362, %v520, 0
      %v528 = vsel %vm362, %v517, 0
      %530 = vmatpush.msra.mxu0 0.0
      %531 = vmatpush.msra.mxu0 0.0
      %532 = vmatpush.msra.mxu0 0.0
      %533 = vmatpush.msra.mxu0 0.0
      %534 = vmatpush.msra.mxu0 0.0
      %535 = vmatpush.msra.mxu0 0.0
      %536 = vmatpush.msra.mxu0 0.0
      %537 = vmatpush.msra.mxu0 0.0
      %538 = vmatpush.msra.mxu0 0.0
      %539 = vmatpush.msra.mxu0 0.0
      %540 = vmatpush.msra.mxu0 0.0
      %541 = vmatpush.msra.mxu0 0.0
      %542 = vmatpush.msra.mxu0 0.0
      %543 = vmatpush.msra.mxu0 0.0
      %544 = vmatpush.msra.mxu0 0.0
      %545 = vmatpush.msra.mxu0 %v524
      %546 = vmatmul.f32.gmra.mxu0 %v522
      %v547 = vpop.f32.mrf.mxu0
      %v548 = vadd.f32 0.0, %v547
      %549 = vdwg.mxu0
      %550 = vmatpush.msra.mxu0 0.0
      %551 = vmatpush.msra.mxu0 0.0
      %552 = vmatpush.msra.mxu0 0.0
      %553 = vmatpush.msra.mxu0 0.0
      %554 = vmatpush.msra.mxu0 0.0
      %555 = vmatpush.msra.mxu0 0.0
      %556 = vmatpush.msra.mxu0 0.0
      %557 = vmatpush.msra.mxu0 0.0
      %558 = vmatpush.msra.mxu0 0.0
      %559 = vmatpush.msra.mxu0 0.0
      %560 = vmatpush.msra.mxu0 0.0
      %561 = vmatpush.msra.mxu0 0.0
      %562 = vmatpush.msra.mxu0 0.0
      %563 = vmatpush.msra.mxu0 0.0
      %564 = vmatpush.msra.mxu0 0.0
      %565 = vmatpush.msra.mxu0 %v526
      %566 = vmatmul.f32.gmra.mxu0 %v522
      %v567 = vpop.f32.mrf.mxu0
      %v568 = vadd.f32 0.0, %v567
      %569 = vdwg.mxu0
      %570 = vmatpush.msra.mxu0 0.0
      %571 = vmatpush.msra.mxu0 0.0
      %572 = vmatpush.msra.mxu0 0.0
      %573 = vmatpush.msra.mxu0 0.0
      %574 = vmatpush.msra.mxu0 0.0
      %575 = vmatpush.msra.mxu0 0.0
      %576 = vmatpush.msra.mxu0 0.0
      %577 = vmatpush.msra.mxu0 0.0
      %578 = vmatpush.msra.mxu0 0.0
      %579 = vmatpush.msra.mxu0 0.0
      %580 = vmatpush.msra.mxu0 0.0
      %581 = vmatpush.msra.mxu0 0.0
      %582 = vmatpush.msra.mxu0 0.0
      %583 = vmatpush.msra.mxu0 0.0
      %584 = vmatpush.msra.mxu0 0.0
      %585 = vmatpush.msra.mxu0 %v528
      %586 = vmatmul.f32.gmra.mxu0 %v522
      %v587 = vpop.f32.mrf.mxu0
      %v588 = vadd.f32 0.0, %v587
      %589 = vdwg.mxu0
      %v590 = vadd.f32 %v462, %v548
      %v591 = vadd.f32 %v482, %v568
      %v592 = vadd.f32 %v502, %v588
      %v593 = vld [vmem:[#allocation2] sm:$0xff]
      %v594 = vld [vmem:[#allocation2 + $0x8] sm:$0xf]
      %s595 = scalar_lea.vmem %s1, 12
      %v596 = vld [vmem:[%s595] sm:$0xf]
      %599 = vst [vmem:[#allocation1] ss:$2 sm:$0xff] %v593
      %s600 = scalar_lea.vmem [#allocation1], 16
      %601 = vst [vmem:[%s600] ss:$2 sm:$0xff] %v594
      %v602 = vld.sshfl [vmem:[#allocation1] sm:$0xff pattern:$0x75316420]
      %v603 = vld.sshfl [vmem:[#allocation1 + $0x8] sm:$0xff pattern:$0x75316420]
      %v604 = vld.sshfl [vmem:[#allocation1 + $0x10] sm:$0xff pattern:$0x75316420]
      %605 = vrot.lane.b32.xlu0 %v602, 110
      %v606 = vpop.permute.xlu0 %605
      %607 = vrot.lane.b32.xlu0 %v603, 110
      %v608 = vpop.permute.xlu0 %607
      %609 = vrot.lane.b32.xlu0 %v604, 110
      %v610 = vpop.permute.xlu0 %609
      %vm611 = vcmask 900096
      %v612 = vsel %vm611, %v606, %v608
      %v613 = vsel %vm611, %v608, %v610
      %v615 = vsel %vm358, %v596, 0
      %v617 = vsel %vm362, %v612, 0
      %v619 = vsel %vm362, %v613, 0
      %v621 = vsel %vm362, %v610, 0
      %623 = vmatpush.msra.mxu0 0.0
      %624 = vmatpush.msra.mxu0 0.0
      %625 = vmatpush.msra.mxu0 0.0
      %626 = vmatpush.msra.mxu0 0.0
      %627 = vmatpush.msra.mxu0 0.0
      %628 = vmatpush.msra.mxu0 0.0
      %629 = vmatpush.msra.mxu0 0.0
      %630 = vmatpush.msra.mxu0 0.0
      %631 = vmatpush.msra.mxu0 0.0
      %632 = vmatpush.msra.mxu0 0.0
      %633 = vmatpush.msra.mxu0 0.0
      %634 = vmatpush.msra.mxu0 0.0
      %635 = vmatpush.msra.mxu0 0.0
      %636 = vmatpush.msra.mxu0 0.0
      %637 = vmatpush.msra.mxu0 0.0
      %638 = vmatpush.msra.mxu0 %v617
      %639 = vmatmul.f32.gmra.mxu0 %v615
      %v640 = vpop.f32.mrf.mxu0
      %v641 = vadd.f32 0.0, %v640
      %642 = vdwg.mxu0
      %643 = vmatpush.msra.mxu0 0.0
      %644 = vmatpush.msra.mxu0 0.0
      %645 = vmatpush.msra.mxu0 0.0
      %646 = vmatpush.msra.mxu0 0.0
      %647 = vmatpush.msra.mxu0 0.0
      %648 = vmatpush.msra.mxu0 0.0
      %649 = vmatpush.msra.mxu0 0.0
      %650 = vmatpush.msra.mxu0 0.0
      %651 = vmatpush.msra.mxu0 0.0
      %652 = vmatpush.msra.mxu0 0.0
      %653 = vmatpush.msra.mxu0 0.0
      %654 = vmatpush.msra.mxu0 0.0
      %655 = vmatpush.msra.mxu0 0.0
      %656 = vmatpush.msra.mxu0 0.0
      %657 = vmatpush.msra.mxu0 0.0
      %658 = vmatpush.msra.mxu0 %v619
      %659 = vmatmul.f32.gmra.mxu0 %v615
      %v660 = vpop.f32.mrf.mxu0
      %v661 = vadd.f32 0.0, %v660
      %662 = vdwg.mxu0
      %663 = vmatpush.msra.mxu0 0.0
      %664 = vmatpush.msra.mxu0 0.0
      %665 = vmatpush.msra.mxu0 0.0
      %666 = vmatpush.msra.mxu0 0.0
      %667 = vmatpush.msra.mxu0 0.0
      %668 = vmatpush.msra.mxu0 0.0
      %669 = vmatpush.msra.mxu0 0.0
      %670 = vmatpush.msra.mxu0 0.0
      %671 = vmatpush.msra.mxu0 0.0
      %672 = vmatpush.msra.mxu0 0.0
      %673 = vmatpush.msra.mxu0 0.0
      %674 = vmatpush.msra.mxu0 0.0
      %675 = vmatpush.msra.mxu0 0.0
      %676 = vmatpush.msra.mxu0 0.0
      %677 = vmatpush.msra.mxu0 0.0
      %678 = vmatpush.msra.mxu0 %v621
      %679 = vmatmul.f32.gmra.mxu0 %v615
      %v680 = vpop.f32.mrf.mxu0
      %v681 = vadd.f32 0.0, %v680
      %682 = vdwg.mxu0
      %v683 = vadd.f32 %v590, %v641
      %v684 = vadd.f32 %v591, %v661
      %v685 = vadd.f32 %v592, %v681
      %s686 = scalar_lea.vmem %s1, 16
      %v687 = vld [vmem:[%s686] sm:$0xf]
      %688 = vst [vmem:[#allocation1] ss:$2 sm:$0xff] %v593
      %s689 = scalar_lea.vmem [#allocation1], 16
      %690 = vst [vmem:[%s689] ss:$2 sm:$0xff] %v594
      %v691 = vld.sshfl [vmem:[#allocation1] sm:$0xff pattern:$0x75316420]
      %v692 = vld.sshfl [vmem:[#allocation1 + $0x8] sm:$0xff pattern:$0x75316420]
      %v693 = vld.sshfl [vmem:[#allocation1 + $0x10] sm:$0xff pattern:$0x75316420]
      %694 = vrot.lane.b32.xlu0 %v691, 109
      %v695 = vpop.permute.xlu0 %694
      %696 = vrot.lane.b32.xlu0 %v692, 109
      %v697 = vpop.permute.xlu0 %696
      %698 = vrot.lane.b32.xlu0 %v693, 109
      %v699 = vpop.permute.xlu0 %698
      %vm700 = vcmask 891904
      %v701 = vsel %vm700, %v695, %v697
      %v702 = vsel %vm700, %v697, %v699
      %v704 = vsel %vm358, %v687, 0
      %v706 = vsel %vm362, %v701, 0
      %v708 = vsel %vm362, %v702, 0
      %v710 = vsel %vm362, %v699, 0
      %712 = vmatpush.msra.mxu0 0.0
      %713 = vmatpush.msra.mxu0 0.0
      %714 = vmatpush.msra.mxu0 0.0
      %715 = vmatpush.msra.mxu0 0.0
      %716 = vmatpush.msra.mxu0 0.0
      %717 = vmatpush.msra.mxu0 0.0
      %718 = vmatpush.msra.mxu0 0.0
      %719 = vmatpush.msra.mxu0 0.0
      %720 = vmatpush.msra.mxu0 0.0
      %721 = vmatpush.msra.mxu0 0.0
      %722 = vmatpush.msra.mxu0 0.0
      %723 = vmatpush.msra.mxu0 0.0
      %724 = vmatpush.msra.mxu0 0.0
      %725 = vmatpush.msra.mxu0 0.0
      %726 = vmatpush.msra.mxu0 0.0
      %727 = vmatpush.msra.mxu0 %v706
      %728 = vmatmul.f32.gmra.mxu0 %v704
      %v729 = vpop.f32.mrf.mxu0
      %v730 = vadd.f32 0.0, %v729
      %731 = vdwg.mxu0
      %732 = vmatpush.msra.mxu0 0.0
      %733 = vmatpush.msra.mxu0 0.0
      %734 = vmatpush.msra.mxu0 0.0
      %735 = vmatpush.msra.mxu0 0.0
      %736 = vmatpush.msra.mxu0 0.0
      %737 = vmatpush.msra.mxu0 0.0
      %738 = vmatpush.msra.mxu0 0.0
      %739 = vmatpush.msra.mxu0 0.0
      %740 = vmatpush.msra.mxu0 0.0
      %741 = vmatpush.msra.mxu0 0.0
      %742 = vmatpush.msra.mxu0 0.0
      %743 = vmatpush.msra.mxu0 0.0
      %744 = vmatpush.msra.mxu0 0.0
      %745 = vmatpush.msra.mxu0 0.0
      %746 = vmatpush.msra.mxu0 0.0
      %747 = vmatpush.msra.mxu0 %v708
      %748 = vmatmul.f32.gmra.mxu0 %v704
      %v749 = vpop.f32.mrf.mxu0
      %v750 = vadd.f32 0.0, %v749
      %751 = vdwg.mxu0
      %752 = vmatpush.msra.mxu0 0.0
      %753 = vmatpush.msra.mxu0 0.0
      %754 = vmatpush.msra.mxu0 0.0
      %755 = vmatpush.msra.mxu0 0.0
      %756 = vmatpush.msra.mxu0 0.0
      %757 = vmatpush.msra.mxu0 0.0
      %758 = vmatpush.msra.mxu0 0.0
      %759 = vmatpush.msra.mxu0 0.0
      %760 = vmatpush.msra.mxu0 0.0
      %761 = vmatpush.msra.mxu0 0.0
      %762 = vmatpush.msra.mxu0 0.0
      %763 = vmatpush.msra.mxu0 0.0
      %764 = vmatpush.msra.mxu0 0.0
      %765 = vmatpush.msra.mxu0 0.0
      %766 = vmatpush.msra.mxu0 0.0
      %767 = vmatpush.msra.mxu0 %v710
      %768 = vmatmul.f32.gmra.mxu0 %v704
      %v769 = vpop.f32.mrf.mxu0
      %v770 = vadd.f32 0.0, %v769
      %771 = vdwg.mxu0
      %v772 = vadd.f32 %v683, %v730
      %v773 = vadd.f32 %v684, %v750
      %v774 = vadd.f32 %v685, %v770
      %s775 = scalar_lea.vmem %s1, 20
      %v776 = vld [vmem:[%s775] sm:$0xf]
      %777 = vst [vmem:[#allocation1] ss:$2 sm:$0xff] %v593
      %s778 = scalar_lea.vmem [#allocation1], 16
      %779 = vst [vmem:[%s778] ss:$2 sm:$0xff] %v594
      %v780 = vld.sshfl [vmem:[#allocation1] sm:$0xff pattern:$0x75316420]
      %v781 = vld.sshfl [vmem:[#allocation1 + $0x8] sm:$0xff pattern:$0x75316420]
      %v782 = vld.sshfl [vmem:[#allocation1 + $0x10] sm:$0xff pattern:$0x75316420]
      %783 = vrot.lane.b32.xlu0 %v780, 108
      %v784 = vpop.permute.xlu0 %783
      %785 = vrot.lane.b32.xlu0 %v781, 108
      %v786 = vpop.permute.xlu0 %785
      %787 = vrot.lane.b32.xlu0 %v782, 108
      %v788 = vpop.permute.xlu0 %787
      %vm789 = vcmask 883712
      %v790 = vsel %vm789, %v784, %v786
      %v791 = vsel %vm789, %v786, %v788
      %v793 = vsel %vm358, %v776, 0
      %v795 = vsel %vm362, %v790, 0
      %v797 = vsel %vm362, %v791, 0
      %v799 = vsel %vm362, %v788, 0
      %801 = vmatpush.msra.mxu0 0.0
      %802 = vmatpush.msra.mxu0 0.0
      %803 = vmatpush.msra.mxu0 0.0
      %804 = vmatpush.msra.mxu0 0.0
      %805 = vmatpush.msra.mxu0 0.0
      %806 = vmatpush.msra.mxu0 0.0
      %807 = vmatpush.msra.mxu0 0.0
      %808 = vmatpush.msra.mxu0 0.0
      %809 = vmatpush.msra.mxu0 0.0
      %810 = vmatpush.msra.mxu0 0.0
      %811 = vmatpush.msra.mxu0 0.0
      %812 = vmatpush.msra.mxu0 0.0
      %813 = vmatpush.msra.mxu0 0.0
      %814 = vmatpush.msra.mxu0 0.0
      %815 = vmatpush.msra.mxu0 0.0
      %816 = vmatpush.msra.mxu0 %v795
      %817 = vmatmul.f32.gmra.mxu0 %v793
      %v818 = vpop.f32.mrf.mxu0
      %v819 = vadd.f32 0.0, %v818
      %820 = vdwg.mxu0
      %821 = vmatpush.msra.mxu0 0.0
      %822 = vmatpush.msra.mxu0 0.0
      %823 = vmatpush.msra.mxu0 0.0
      %824 = vmatpush.msra.mxu0 0.0
      %825 = vmatpush.msra.mxu0 0.0
      %826 = vmatpush.msra.mxu0 0.0
      %827 = vmatpush.msra.mxu0 0.0
      %828 = vmatpush.msra.mxu0 0.0
      %829 = vmatpush.msra.mxu0 0.0
      %830 = vmatpush.msra.mxu0 0.0
      %831 = vmatpush.msra.mxu0 0.0
      %832 = vmatpush.msra.mxu0 0.0
      %833 = vmatpush.msra.mxu0 0.0
      %834 = vmatpush.msra.mxu0 0.0
      %835 = vmatpush.msra.mxu0 0.0
      %836 = vmatpush.msra.mxu0 %v797
      %837 = vmatmul.f32.gmra.mxu0 %v793
      %v838 = vpop.f32.mrf.mxu0
      %v839 = vadd.f32 0.0, %v838
      %840 = vdwg.mxu0
      %841 = vmatpush.msra.mxu0 0.0
      %842 = vmatpush.msra.mxu0 0.0
      %843 = vmatpush.msra.mxu0 0.0
      %844 = vmatpush.msra.mxu0 0.0
      %845 = vmatpush.msra.mxu0 0.0
      %846 = vmatpush.msra.mxu0 0.0
      %847 = vmatpush.msra.mxu0 0.0
      %848 = vmatpush.msra.mxu0 0.0
      %849 = vmatpush.msra.mxu0 0.0
      %850 = vmatpush.msra.mxu0 0.0
      %851 = vmatpush.msra.mxu0 0.0
      %852 = vmatpush.msra.mxu0 0.0
      %853 = vmatpush.msra.mxu0 0.0
      %854 = vmatpush.msra.mxu0 0.0
      %855 = vmatpush.msra.mxu0 0.0
      %856 = vmatpush.msra.mxu0 %v799
      %857 = vmatmul.f32.gmra.mxu0 %v793
      %v858 = vpop.f32.mrf.mxu0
      %v859 = vadd.f32 0.0, %v858
      %860 = vdwg.mxu0
      %v861 = vadd.f32 %v772, %v819
      %v862 = vadd.f32 %v773, %v839
      %v863 = vadd.f32 %v774, %v859
      %v864 = vld [vmem:[#allocation2] sm:$0xff]
      %v865 = vld [vmem:[#allocation2 + $0x8] sm:$0xf]
      %s866 = scalar_lea.vmem %s1, 24
      %v867 = vld [vmem:[%s866] sm:$0xf]
      %870 = vst [vmem:[#allocation1] ss:$2 sm:$0xff] %v864
      %s871 = scalar_lea.vmem [#allocation1], 16
      %872 = vst [vmem:[%s871] ss:$2 sm:$0xff] %v865
      %v873 = vld.sshfl [vmem:[#allocation1] sm:$0xff pattern:$0x75316420]
      %v874 = vld.sshfl [vmem:[#allocation1 + $0x8] sm:$0xff pattern:$0x75316420]
      %v875 = vld.sshfl [vmem:[#allocation1 + $0x10] sm:$0xff pattern:$0x75316420]
      %876 = vrot.lane.b32.xlu0 %v873, 92
      %v877 = vpop.permute.xlu0 %876
      %878 = vrot.lane.b32.xlu0 %v874, 92
      %v879 = vpop.permute.xlu0 %878
      %880 = vrot.lane.b32.xlu0 %v875, 92
      %v881 = vpop.permute.xlu0 %880
      %vm882 = vcmask 752640
      %v883 = vsel %vm882, %v877, %v879
      %v884 = vsel %vm882, %v879, %v881
      %v886 = vsel %vm358, %v867, 0
      %v888 = vsel %vm362, %v883, 0
      %v890 = vsel %vm362, %v884, 0
      %v892 = vsel %vm362, %v881, 0
      %894 = vmatpush.msra.mxu0 0.0
      %895 = vmatpush.msra.mxu0 0.0
      %896 = vmatpush.msra.mxu0 0.0
      %897 = vmatpush.msra.mxu0 0.0
      %898 = vmatpush.msra.mxu0 0.0
      %899 = vmatpush.msra.mxu0 0.0
      %900 = vmatpush.msra.mxu0 0.0
      %901 = vmatpush.msra.mxu0 0.0
      %902 = vmatpush.msra.mxu0 0.0
      %903 = vmatpush.msra.mxu0 0.0
      %904 = vmatpush.msra.mxu0 0.0
      %905 = vmatpush.msra.mxu0 0.0
      %906 = vmatpush.msra.mxu0 0.0
      %907 = vmatpush.msra.mxu0 0.0
      %908 = vmatpush.msra.mxu0 0.0
      %909 = vmatpush.msra.mxu0 %v888
      %910 = vmatmul.f32.gmra.mxu0 %v886
      %v911 = vpop.f32.mrf.mxu0
      %v912 = vadd.f32 0.0, %v911
      %913 = vdwg.mxu0
      %914 = vmatpush.msra.mxu0 0.0
      %915 = vmatpush.msra.mxu0 0.0
      %916 = vmatpush.msra.mxu0 0.0
      %917 = vmatpush.msra.mxu0 0.0
      %918 = vmatpush.msra.mxu0 0.0
      %919 = vmatpush.msra.mxu0 0.0
      %920 = vmatpush.msra.mxu0 0.0
      %921 = vmatpush.msra.mxu0 0.0
      %922 = vmatpush.msra.mxu0 0.0
      %923 = vmatpush.msra.mxu0 0.0
      %924 = vmatpush.msra.mxu0 0.0
      %925 = vmatpush.msra.mxu0 0.0
      %926 = vmatpush.msra.mxu0 0.0
      %927 = vmatpush.msra.mxu0 0.0
      %928 = vmatpush.msra.mxu0 0.0
      %929 = vmatpush.msra.mxu0 %v890
      %930 = vmatmul.f32.gmra.mxu0 %v886
      %v931 = vpop.f32.mrf.mxu0
      %v932 = vadd.f32 0.0, %v931
      %933 = vdwg.mxu0
      %934 = vmatpush.msra.mxu0 0.0
      %935 = vmatpush.msra.mxu0 0.0
      %936 = vmatpush.msra.mxu0 0.0
      %937 = vmatpush.msra.mxu0 0.0
      %938 = vmatpush.msra.mxu0 0.0
      %939 = vmatpush.msra.mxu0 0.0
      %940 = vmatpush.msra.mxu0 0.0
      %941 = vmatpush.msra.mxu0 0.0
      %942 = vmatpush.msra.mxu0 0.0
      %943 = vmatpush.msra.mxu0 0.0
      %944 = vmatpush.msra.mxu0 0.0
      %945 = vmatpush.msra.mxu0 0.0
      %946 = vmatpush.msra.mxu0 0.0
      %947 = vmatpush.msra.mxu0 0.0
      %948 = vmatpush.msra.mxu0 0.0
      %949 = vmatpush.msra.mxu0 %v892
      %950 = vmatmul.f32.gmra.mxu0 %v886
      %v951 = vpop.f32.mrf.mxu0
      %v952 = vadd.f32 0.0, %v951
      %953 = vdwg.mxu0
      %v954 = vadd.f32 %v861, %v912
      %v955 = vadd.f32 %v862, %v932
      %v956 = vadd.f32 %v863, %v952
      %s957 = scalar_lea.vmem %s1, 28
      %v958 = vld [vmem:[%s957] sm:$0xf]
      %959 = vst [vmem:[#allocation1] ss:$2 sm:$0xff] %v864
      %s960 = scalar_lea.vmem [#allocation1], 16
      %961 = vst [vmem:[%s960] ss:$2 sm:$0xff] %v865
      %v962 = vld.sshfl [vmem:[#allocation1] sm:$0xff pattern:$0x75316420]
      %v963 = vld.sshfl [vmem:[#allocation1 + $0x8] sm:$0xff pattern:$0x75316420]
      %v964 = vld.sshfl [vmem:[#allocation1 + $0x10] sm:$0xff pattern:$0x75316420]
      %965 = vrot.lane.b32.xlu0 %v962, 91
      %v966 = vpop.permute.xlu0 %965
      %967 = vrot.lane.b32.xlu0 %v963, 91
      %v968 = vpop.permute.xlu0 %967
      %969 = vrot.lane.b32.xlu0 %v964, 91
      %v970 = vpop.permute.xlu0 %969
      %vm971 = vcmask 744448
      %v972 = vsel %vm971, %v966, %v968
      %v973 = vsel %vm971, %v968, %v970
      %v975 = vsel %vm358, %v958, 0
      %v977 = vsel %vm362, %v972, 0
      %v979 = vsel %vm362, %v973, 0
      %v981 = vsel %vm362, %v970, 0
      %983 = vmatpush.msra.mxu0 0.0
      %984 = vmatpush.msra.mxu0 0.0
      %985 = vmatpush.msra.mxu0 0.0
      %986 = vmatpush.msra.mxu0 0.0
      %987 = vmatpush.msra.mxu0 0.0
      %988 = vmatpush.msra.mxu0 0.0
      %989 = vmatpush.msra.mxu0 0.0
      %990 = vmatpush.msra.mxu0 0.0
      %991 = vmatpush.msra.mxu0 0.0
      %992 = vmatpush.msra.mxu0 0.0
      %993 = vmatpush.msra.mxu0 0.0
      %994 = vmatpush.msra.mxu0 0.0
      %995 = vmatpush.msra.mxu0 0.0
      %996 = vmatpush.msra.mxu0 0.0
      %997 = vmatpush.msra.mxu0 0.0
      %998 = vmatpush.msra.mxu0 %v977
      %999 = vmatmul.f32.gmra.mxu0 %v975
      %v1000 = vpop.f32.mrf.mxu0
      %v1001 = vadd.f32 0.0, %v1000
      %1002 = vdwg.mxu0
      %1003 = vmatpush.msra.mxu0 0.0
      %1004 = vmatpush.msra.mxu0 0.0
      %1005 = vmatpush.msra.mxu0 0.0
      %1006 = vmatpush.msra.mxu0 0.0
      %1007 = vmatpush.msra.mxu0 0.0
      %1008 = vmatpush.msra.mxu0 0.0
      %1009 = vmatpush.msra.mxu0 0.0
      %1010 = vmatpush.msra.mxu0 0.0
      %1011 = vmatpush.msra.mxu0 0.0
      %1012 = vmatpush.msra.mxu0 0.0
      %1013 = vmatpush.msra.mxu0 0.0
      %1014 = vmatpush.msra.mxu0 0.0
      %1015 = vmatpush.msra.mxu0 0.0
      %1016 = vmatpush.msra.mxu0 0.0
      %1017 = vmatpush.msra.mxu0 0.0
      %1018 = vmatpush.msra.mxu0 %v979
      %1019 = vmatmul.f32.gmra.mxu0 %v975
      %v1020 = vpop.f32.mrf.mxu0
      %v1021 = vadd.f32 0.0, %v1020
      %1022 = vdwg.mxu0
      %1023 = vmatpush.msra.mxu0 0.0
      %1024 = vmatpush.msra.mxu0 0.0
      %1025 = vmatpush.msra.mxu0 0.0
      %1026 = vmatpush.msra.mxu0 0.0
      %1027 = vmatpush.msra.mxu0 0.0
      %1028 = vmatpush.msra.mxu0 0.0
      %1029 = vmatpush.msra.mxu0 0.0
      %1030 = vmatpush.msra.mxu0 0.0
      %1031 = vmatpush.msra.mxu0 0.0
      %1032 = vmatpush.msra.mxu0 0.0
      %1033 = vmatpush.msra.mxu0 0.0
      %1034 = vmatpush.msra.mxu0 0.0
      %1035 = vmatpush.msra.mxu0 0.0
      %1036 = vmatpush.msra.mxu0 0.0
      %1037 = vmatpush.msra.mxu0 0.0
      %1038 = vmatpush.msra.mxu0 %v981
      %1039 = vmatmul.f32.gmra.mxu0 %v975
      %v1040 = vpop.f32.mrf.mxu0
      %v1041 = vadd.f32 0.0, %v1040
      %1042 = vdwg.mxu0
      %v1043 = vadd.f32 %v954, %v1001
      %v1044 = vadd.f32 %v955, %v1021
      %v1045 = vadd.f32 %v956, %v1041
      %s1046 = scalar_lea.vmem %s1, 32
      %v1047 = vld [vmem:[%s1046] sm:$0xf]
      %1048 = vst [vmem:[#allocation1] ss:$2 sm:$0xff] %v864
      %s1049 = scalar_lea.vmem [#allocation1], 16
      %1050 = vst [vmem:[%s1049] ss:$2 sm:$0xff] %v865
      %v1051 = vld.sshfl [vmem:[#allocation1] sm:$0xff pattern:$0x75316420]
      %v1052 = vld.sshfl [vmem:[#allocation1 + $0x8] sm:$0xff pattern:$0x75316420]
      %v1053 = vld.sshfl [vmem:[#allocation1 + $0x10] sm:$0xff pattern:$0x75316420]
      %1054 = vrot.lane.b32.xlu0 %v1051, 90
      %v1055 = vpop.permute.xlu0 %1054
      %1056 = vrot.lane.b32.xlu0 %v1052, 90
      %v1057 = vpop.permute.xlu0 %1056
      %1058 = vrot.lane.b32.xlu0 %v1053, 90
      %v1059 = vpop.permute.xlu0 %1058
      %vm1060 = vcmask 736256
      %v1061 = vsel %vm1060, %v1055, %v1057
      %v1062 = vsel %vm1060, %v1057, %v1059
      %v1064 = vsel %vm358, %v1047, 0
      %v1066 = vsel %vm362, %v1061, 0
      %v1068 = vsel %vm362, %v1062, 0
      %v1070 = vsel %vm362, %v1059, 0
      %1072 = vmatpush.msra.mxu0 0.0
      %1073 = vmatpush.msra.mxu0 0.0
      %1074 = vmatpush.msra.mxu0 0.0
      %1075 = vmatpush.msra.mxu0 0.0
      %1076 = vmatpush.msra.mxu0 0.0
      %1077 = vmatpush.msra.mxu0 0.0
      %1078 = vmatpush.msra.mxu0 0.0
      %1079 = vmatpush.msra.mxu0 0.0
      %1080 = vmatpush.msra.mxu0 0.0
      %1081 = vmatpush.msra.mxu0 0.0
      %1082 = vmatpush.msra.mxu0 0.0
      %1083 = vmatpush.msra.mxu0 0.0
      %1084 = vmatpush.msra.mxu0 0.0
      %1085 = vmatpush.msra.mxu0 0.0
      %1086 = vmatpush.msra.mxu0 0.0
      %1087 = vmatpush.msra.mxu0 %v1066
      %1088 = vmatmul.f32.gmra.mxu0 %v1064
      %v1089 = vpop.f32.mrf.mxu0
      %v1090 = vadd.f32 0.0, %v1089
      %1091 = vdwg.mxu0
      %1092 = vmatpush.msra.mxu0 0.0
      %1093 = vmatpush.msra.mxu0 0.0
      %1094 = vmatpush.msra.mxu0 0.0
      %1095 = vmatpush.msra.mxu0 0.0
      %1096 = vmatpush.msra.mxu0 0.0
      %1097 = vmatpush.msra.mxu0 0.0
      %1098 = vmatpush.msra.mxu0 0.0
      %1099 = vmatpush.msra.mxu0 0.0
      %1100 = vmatpush.msra.mxu0 0.0
      %1101 = vmatpush.msra.mxu0 0.0
      %1102 = vmatpush.msra.mxu0 0.0
      %1103 = vmatpush.msra.mxu0 0.0
      %1104 = vmatpush.msra.mxu0 0.0
      %1105 = vmatpush.msra.mxu0 0.0
      %1106 = vmatpush.msra.mxu0 0.0
      %1107 = vmatpush.msra.mxu0 %v1068
      %1108 = vmatmul.f32.gmra.mxu0 %v1064
      %v1109 = vpop.f32.mrf.mxu0
      %v1110 = vadd.f32 0.0, %v1109
      %1111 = vdwg.mxu0
      %1112 = vmatpush.msra.mxu0 0.0
      %1113 = vmatpush.msra.mxu0 0.0
      %1114 = vmatpush.msra.mxu0 0.0
      %1115 = vmatpush.msra.mxu0 0.0
      %1116 = vmatpush.msra.mxu0 0.0
      %1117 = vmatpush.msra.mxu0 0.0
      %1118 = vmatpush.msra.mxu0 0.0
      %1119 = vmatpush.msra.mxu0 0.0
      %1120 = vmatpush.msra.mxu0 0.0
      %1121 = vmatpush.msra.mxu0 0.0
      %1122 = vmatpush.msra.mxu0 0.0
      %1123 = vmatpush.msra.mxu0 0.0
      %1124 = vmatpush.msra.mxu0 0.0
      %1125 = vmatpush.msra.mxu0 0.0
      %1126 = vmatpush.msra.mxu0 0.0
      %1127 = vmatpush.msra.mxu0 %v1070
      %1128 = vmatmul.f32.gmra.mxu0 %v1064
      %v1129 = vpop.f32.mrf.mxu0
      %v1130 = vadd.f32 0.0, %v1129
      %1131 = vdwg.mxu0
      %v1132 = vadd.f32 %v1043, %v1090
      %v1133 = vadd.f32 %v1044, %v1110
      %v1134 = vadd.f32 %v1045, %v1130
      %v1135 = vld [vmem:[%s2] sm:$0xf]
      %1137 = vset.pattern.permute.xlu0 0
      %1138 = vperm.xlu0 %1137, %v1135
      %v1139 = vpop.permute.xlu0 %1138
      %v1141 = vadd.f32 %v1132, %v1139
      %v1142 = vadd.f32 %v1133, %v1139
      %v1143 = vadd.f32 %v1134, %v1139
      %v1144 = vmax.f32 %v1141, 0.0
      %v1145 = vmax.f32 %v1142, 0.0
      %v1146 = vmax.f32 %v1143, 0.0
      %v1147 = vld [vmem:[%s3] sm:$0xff]
      %v1148 = vld [vmem:[%s4] sm:$0xff]
      %1150 = vset.pattern.permute.xlu0 0
      %1151 = vperm.xlu0 %1150, %v1148
      %v1152 = vpop.permute.xlu0 %1151
      %v1155 = vsel %vm358, %v1147, 0
      %v1158 = vsel %vm362, %v1144, 0
      %v1161 = vsel %vm362, %v1145, 0
      %v1164 = vsel %vm362, %v1146, 0
      %1166 = vmatpush.msra.mxu0 0.0
      %1167 = vmatpush.msra.mxu0 0.0
      %1168 = vmatpush.msra.mxu0 0.0
      %1169 = vmatpush.msra.mxu0 0.0
      %1170 = vmatpush.msra.mxu0 0.0
      %1171 = vmatpush.msra.mxu0 0.0
      %1172 = vmatpush.msra.mxu0 0.0
      %1173 = vmatpush.msra.mxu0 0.0
      %1174 = vmatpush.msra.mxu0 0.0
      %1175 = vmatpush.msra.mxu0 0.0
      %1176 = vmatpush.msra.mxu0 0.0
      %1177 = vmatpush.msra.mxu0 0.0
      %1178 = vmatpush.msra.mxu0 0.0
      %1179 = vmatpush.msra.mxu0 0.0
      %1180 = vmatpush.msra.mxu0 0.0
      %1181 = vmatpush.msra.mxu0 %v1158
      %1182 = vmatmul.f32.gmra.mxu0 %v1155
      %v1183 = vpop.f32.mrf.mxu0
      %v1184 = vadd.f32 %v1152, %v1183
      %1185 = vdwg.mxu0
      %1186 = vmatpush.msra.mxu0 0.0
      %1187 = vmatpush.msra.mxu0 0.0
      %1188 = vmatpush.msra.mxu0 0.0
      %1189 = vmatpush.msra.mxu0 0.0
      %1190 = vmatpush.msra.mxu0 0.0
      %1191 = vmatpush.msra.mxu0 0.0
      %1192 = vmatpush.msra.mxu0 0.0
      %1193 = vmatpush.msra.mxu0 0.0
      %1194 = vmatpush.msra.mxu0 0.0
      %1195 = vmatpush.msra.mxu0 0.0
      %1196 = vmatpush.msra.mxu0 0.0
      %1197 = vmatpush.msra.mxu0 0.0
      %1198 = vmatpush.msra.mxu0 0.0
      %1199 = vmatpush.msra.mxu0 0.0
      %1200 = vmatpush.msra.mxu0 0.0
      %1201 = vmatpush.msra.mxu0 %v1161
      %1202 = vmatmul.f32.gmra.mxu0 %v1155
      %v1203 = vpop.f32.mrf.mxu0
      %v1204 = vadd.f32 %v1152, %v1203
      %1205 = vdwg.mxu0
      %1206 = vmatpush.msra.mxu0 0.0
      %1207 = vmatpush.msra.mxu0 0.0
      %1208 = vmatpush.msra.mxu0 0.0
      %1209 = vmatpush.msra.mxu0 0.0
      %1210 = vmatpush.msra.mxu0 0.0
      %1211 = vmatpush.msra.mxu0 0.0
      %1212 = vmatpush.msra.mxu0 0.0
      %1213 = vmatpush.msra.mxu0 0.0
      %1214 = vmatpush.msra.mxu0 0.0
      %1215 = vmatpush.msra.mxu0 0.0
      %1216 = vmatpush.msra.mxu0 0.0
      %1217 = vmatpush.msra.mxu0 0.0
      %1218 = vmatpush.msra.mxu0 0.0
      %1219 = vmatpush.msra.mxu0 0.0
      %1220 = vmatpush.msra.mxu0 0.0
      %1221 = vmatpush.msra.mxu0 %v1164
      %1222 = vmatmul.f32.gmra.mxu0 %v1155
      %v1223 = vpop.f32.mrf.mxu0
      %v1224 = vadd.f32 %v1152, %v1223
      %1225 = vdwg.mxu0
      %v1226 = vpack.c.bf16 %v1204, %v1184
      %v1227 = vpack.c.bf16 %v1224, %v1224
      %1228 = vst [vmem:[%s224] sm:$0xff] %v1226
      %vm1229 = vcmask 257024
      %1230 = vst.msk [vmem:[%s224 + $0x8] sm:$0xf] %vm1229, %v1227
      %p1231 = scmp.lt.s32.totalorder %s16, 1
      %s1232 = scalar_select %p1231, %s16, 1
      %s1233 = smul.addr %s1232, 3
      %s1234 = smul.addr %s1233, 4
      %s1235 = scalar_lea.vmem %s5, %s1234
      // Predicated region
      $region41: #{anchor_free_forward.1} parent=39 // pred_check
        %p1236 = pneg %p144
      $region42: #{anchor_free_forward.1} parent=39 // pred_check_branch
        %1238 = sbr.rel (%p1236) target = $region44
      $region43: #{anchor_free_forward.1} parent=39 // pred_region
        _
      $region44: #{anchor_free_forward.1} parent=39 // pred_fallthru
        _
    $region40: #{anchor_free_forward.1} parent=5 // pred_fallthru
      _
    %p1239 = scmp.le.s32.totalorder 2, %s11
    // Predicated region
    $region45: #{anchor_free_forward.1} parent=5 // pred_check
      %p1240 = pneg %p1239
    $region46: #{anchor_free_forward.1} parent=5 // pred_check_branch
      %1242 = sbr.rel (%p1240) target = $region48
    $region47: #{anchor_free_forward.1} parent=5 // pred_region
      %s1243 = ssub.s32 %s11, 2
      // Predicated region
      $region49: #{anchor_free_forward.1} parent=47 // pred_check
        %p1244 = pneg %p150
      $region50: #{anchor_free_forward.1} parent=47 // pred_check_branch
        %1246 = sbr.rel (%p1244) target = $region52
      $region51: #{anchor_free_forward.1} parent=47 // pred_region
        %p1247 = scmp.lt.s32.totalorder %s17, 1
        %s1248 = scalar_select %p1247, %s17, 1
        %s1249 = smul.addr %s1248, 3
        %s1250 = smul.addr %s1249, 4
        %s1251 = scalar_lea.vmem %s5, %s1250
      $region52: #{anchor_free_forward.1} parent=47 // pred_fallthru
        _
    $region48: #{anchor_free_forward.1} parent=5 // pred_fallthru
      _
  $region6: #{anchor_free_forward.1} parent=0 // loop_footer
    %s15 = sadd.s32 1, %s11
  $region7: #{anchor_free_forward.1} parent=0 // loop_footer_branch
    %10 = sbr.rel target = $region3
  $region8: #{anchor_free_forward.1} parent=0 // loop_exit
    _

</llo_original>
